<compile_context>
chip_gen: v5e
topology: v5e:2x2
jax: 0.10.0
libtpu: 0.0.40
codegen_flags: <defaults>
</compile_context>

<pallas_src>
import jax
import jax.numpy as jnp
import numpy as np
from jax.experimental import pallas as pl
from jax.experimental.pallas import tpu as pltpu


def _largest_divisor_leq(n, cap):
    cap = max(1, min(n, cap))
    for d in range(cap, 0, -1):
        if n % d == 0:
            return d
    return 1


def _pick_row_tile(H, W, c_max, itemsize, budget_bytes=2 << 20):
    """Rows per grid step: bounds the (TH+2, W, 9*C) im2col patch in VMEM."""
    per_row = max(1, W * 9 * c_max * itemsize)
    max_rows = max(1, budget_bytes // per_row)
    if H >= 8:
        # keep at least 2 row blocks: pipeline depth + megacore row sharding.
        max_rows = min(max_rows, max(1, H // 2))
    return _largest_divisor_leq(H, min(max_rows, 256))


def _vmem_limit_bytes():
    """Generation-aware scoped-VMEM limit (~70% of physical, capped)."""
    try:
        cap = int(pltpu.get_tpu_info().vmem_capacity_bytes)
    except Exception:
        cap = 64 * 1024 * 1024
    cap = max(cap, 32 * 1024 * 1024)
    return int(min(int(cap * 0.7), 100 * 1024 * 1024))


def _double_conv_kernel(x_ref, w1_ref, b1_ref, w2_ref, b2_ref, o_ref, mid_ref):
    # x_ref:   (H+4, W+2, Cin)   whole zero-padded image of one batch item
    #                            (compute dtype); index map constant in the row
    #                            axis -> DMA'd once per batch item, resident.
    # w1_ref:  (9*Cin, C1)       conv1 im2col weights, BN1 scale folded in.
    # b1_ref:  (1, C1)           BN1 bias (f32).
    # w2_ref:  (9*C1, C2)        conv2 im2col weights, BN2 scale folded in.
    # b2_ref:  (1, C2)           BN2 bias (f32).
    # o_ref:   (TH, W, C2)       output row block (compute dtype).
    # mid_ref: (TH+2, W+2, C1)   VMEM scratch: conv1 activation + 1-px halo.
    TH, W, _ = o_ref.shape
    C1 = mid_ref.shape[-1]
    mdt = mid_ref.dtype

    rb = pl.program_id(1)
    n_rb = pl.num_programs(1)
    r0 = pl.multiple_of(rb * TH, TH)

    def conv3x3(taps, w_ref, b_ref, rows):
        # One MXU matmul per conv: the 9 shifted (rows, W, C) windows are packed
        # (ky, kx, cin)-contiguously along the channel axis -> (rows*W, 9C) x
        # (9C, Cout), f32 accumulation.  No 128-lane channel padding.
        k = 9 * taps[0].shape[-1]
        patch = jnp.concatenate(taps, axis=-1).reshape(rows * W, k)
        y = jnp.dot(patch, w_ref[...], preferred_element_type=jnp.float32)
        y = y + b_ref[...]
        y = jnp.maximum(y, 0.2 * y)          # LeakyReLU(0.2): mul + max
        return y.reshape(rows, W, -1)

    # ---- conv1 + BN1(bias) + LeakyReLU over TH+2 rows ----------------------
    # The extra top/bottom row is the 1-row halo conv2 needs; it is recomputed
    # per row block so every grid step is self-contained (no cross-step scratch
    # state -> safe under megacore grid sharding).
    taps1 = [x_ref[pl.ds(r0 + dy, TH + 2), pl.ds(dx, W), :]
             for dy in range(3) for dx in range(3)]
    mid_ref[:, pl.ds(1, W), :] = conv3x3(taps1, w1_ref, b1_ref, TH + 2).astype(mdt)

    # conv2's zero padding of the conv1 OUTPUT: top/bottom row only at the image
    # boundary; left/right halo columns every step (cheap 1-column stores).
    @pl.when(rb == 0)
    def _():
        mid_ref[pl.ds(0, 1), :, :] = jnp.zeros((1, W + 2, C1), mdt)

    @pl.when(rb == n_rb - 1)
    def _():
        mid_ref[pl.ds(TH + 1, 1), :, :] = jnp.zeros((1, W + 2, C1), mdt)

    zero_col = jnp.zeros((TH + 2, 1, C1), mdt)
    mid_ref[:, pl.ds(0, 1), :] = zero_col
    mid_ref[:, pl.ds(W + 1, 1), :] = zero_col

    # ---- conv2 + BN2(bias) + LeakyReLU over the TH output rows --------------
    taps2 = [mid_ref[pl.ds(dy, TH), pl.ds(dx, W), :]
             for dy in range(3) for dx in range(3)]
    o_ref[...] = conv3x3(taps2, w2_ref, b2_ref, TH).astype(o_ref.dtype)


def double_conv(x_nchw, params, *, compute_dtype=jnp.bfloat16, out_dtype=None):
    """x_nchw: (N, Cin, H, W) float32 -> (N, Cout, H, W) in out_dtype (default compute_dtype)."""
    w1, g1, be1, m1, v1, w2, g2, be2, m2, v2 = params
    eps = 1e-5
    out_dtype = compute_dtype if out_dtype is None else out_dtype
    Cout, Cin = w1.shape[0], w1.shape[1]
    N, _, H, W = x_nchw.shape

    # Fold eval-mode BN: scale into the conv weights, only a per-channel bias remains.
    s1 = g1 / jnp.sqrt(v1 + eps)
    s2 = g2 / jnp.sqrt(v2 + eps)
    b1 = (be1 - m1 * s1).reshape(1, Cout).astype(jnp.float32)
    b2 = (be2 - m2 * s2).reshape(1, Cout).astype(jnp.float32)

    # PyTorch OIHW -> im2col rows ordered (ky, kx, cin); true channel sizes
    # (no padding to 128): K1 = 9*Cin, K2 = 9*Cout.
    w1_mat = (jnp.transpose(w1, (2, 3, 1, 0)) * s1[None, None, None, :]
              ).reshape(9 * Cin, Cout).astype(compute_dtype)
    w2_mat = (jnp.transpose(w2, (2, 3, 1, 0)) * s2[None, None, None, :]
              ).reshape(9 * Cout, Cout).astype(compute_dtype)

    # NCHW -> NHWC; pad H by 2 (halo of the recomputed conv1 halo rows), W by 1.
    x_nhwc = jnp.transpose(x_nchw, (0, 2, 3, 1))
    x_pad = jnp.pad(x_nhwc, ((0, 0), (2, 2), (1, 1), (0, 0))).astype(compute_dtype)

    itemsize = jnp.dtype(compute_dtype).itemsize
    TH = _pick_row_tile(H, W, max(Cin, Cout), itemsize)
    n_rb = H // TH

    cost = pl.CostEstimate(
        flops=2 * N * H * W * 9 * (Cin * Cout + Cout * Cout),
        transcendentals=0,
        bytes_accessed=(N * (H + 4) * (W + 2) * Cin * itemsize
                        + (9 * Cin * Cout + 9 * Cout * Cout) * itemsize
                        + 2 * Cout * 4
                        + N * H * W * Cout * jnp.dtype(out_dtype).itemsize),
    )

    grid_spec = pltpu.PrefetchScalarGridSpec(
        num_scalar_prefetch=0,
        grid=(N, n_rb),
        in_specs=[
            # Whole padded image of one batch item; constant across the row axis
            # so it is fetched once per batch item and stays resident in VMEM.
            pl.BlockSpec((None, H + 4, W + 2, Cin), lambda n, r: (n, 0, 0, 0)),
            # Constant operands: whole-array VMEM residents (single buffer,
            # no per-step double-buffering of weights/biases).
            pl.BlockSpec(memory_space=pltpu.MemorySpace.VMEM),
            pl.BlockSpec(memory_space=pltpu.MemorySpace.VMEM),
            pl.BlockSpec(memory_space=pltpu.MemorySpace.VMEM),
            pl.BlockSpec(memory_space=pltpu.MemorySpace.VMEM),
        ],
        out_specs=pl.BlockSpec((None, TH, W, Cout), lambda n, r: (n, r, 0, 0)),
        scratch_shapes=[pltpu.VMEM((TH + 2, W + 2, Cout), compute_dtype)],
    )

    out_nhwc = pl.pallas_call(
        _double_conv_kernel,
        out_shape=jax.ShapeDtypeStruct((N, H, W, Cout), out_dtype),
        grid_spec=grid_spec,
        compiler_params=pltpu.CompilerParams(
            dimension_semantics=("parallel", "parallel"),
            vmem_limit_bytes=_vmem_limit_bytes(),
        ),
        cost_estimate=cost,
    )(x_pad, w1_mat, b1, w2_mat, b2)

    return jnp.transpose(out_nhwc, (0, 3, 1, 2))


def reference_double_conv(x_nchw, params):
    """Pure-JAX reference (lax conv, HIGHEST precision) with eval-mode BN."""
    w1, g1, be1, m1, v1, w2, g2, be2, m2, v2 = params
    eps = 1e-5

    def bn_lrelu(y, g, be, m, v):
        y = (y - m[None, :, None, None]) / jnp.sqrt(v + eps)[None, :, None, None]
        y = y * g[None, :, None, None] + be[None, :, None, None]
        return jnp.where(y >= 0, y, 0.2 * y)

    dn = jax.lax.conv_dimension_numbers(x_nchw.shape, w1.shape,
                                        ("NCHW", "OIHW", "NCHW"))
    y = jax.lax.conv_general_dilated(x_nchw, w1, (1, 1), ((1, 1), (1, 1)),
                                     dimension_numbers=dn,
                                     precision=jax.lax.Precision.HIGHEST)
    y = bn_lrelu(y, g1, be1, m1, v1)
    y = jax.lax.conv_general_dilated(y, w2, (1, 1), ((1, 1), (1, 1)),
                                     dimension_numbers=dn,
                                     precision=jax.lax.Precision.HIGHEST)
    return bn_lrelu(y, g2, be2, m2, v2)


if __name__ == "__main__":
    N, Cin, Cout, H, W = 2, 4, 8, 16, 16

    key = jax.random.PRNGKey(0)
    keys = jax.random.split(key, 8)

    x = jax.random.normal(keys[0], (N, Cin, H, W), jnp.float32)

    # Deterministic synthetic parameters (no checkpoint load).
    w1 = 0.1 * jax.random.normal(keys[1], (Cout, Cin, 3, 3), jnp.float32)
    g1 = 1.0 + 0.1 * jax.random.normal(keys[2], (Cout,), jnp.float32)
    be1 = 0.1 * jax.random.normal(keys[3], (Cout,), jnp.float32)
    m1 = 0.05 * jax.random.normal(keys[4], (Cout,), jnp.float32)
    v1 = 1.0 + 0.1 * jax.nn.softplus(jax.random.normal(keys[5], (Cout,), jnp.float32))

    w2 = 0.1 * jax.random.normal(keys[6], (Cout, Cout, 3, 3), jnp.float32)
    g2 = 1.0 + 0.1 * jax.random.normal(keys[7], (Cout,), jnp.float32)
    be2 = 0.1 * jnp.sin(jnp.arange(Cout, dtype=jnp.float32))
    m2 = 0.05 * jnp.cos(jnp.arange(Cout, dtype=jnp.float32))
    v2 = 1.0 + 0.1 * (jnp.arange(Cout, dtype=jnp.float32) / Cout)

    params = (w1, g1, be1, m1, v1, w2, g2, be2, m2, v2)

    ref = np.asarray(jax.block_until_ready(reference_double_conv(x, params)))

    # f32 compute path: tight check against the lax reference.
    out_f32 = jax.block_until_ready(double_conv(x, params, compute_dtype=jnp.float32))
    assert out_f32.shape == (N, Cout, H, W)
    np.testing.assert_allclose(np.asarray(out_f32), ref, rtol=1e-3, atol=1e-3)

    # bf16 fast path (f32 accumulation on the MXU, bf16 output): looser tolerance.
    out_bf16 = jax.block_until_ready(double_conv(x, params, compute_dtype=jnp.bfloat16))
    assert out_bf16.shape == (N, Cout, H, W)
    np.testing.assert_allclose(np.asarray(out_bf16.astype(jnp.float32)), ref,
                               rtol=5e-2, atol=5e-2)

    print("KERNEL_OK")
</pallas_src>

<mosaic_0001>
module attributes {stable_mosaic.version = 11 : i64} {
  func.func @_double_conv_kernel(%arg0: i32, %arg1: i32, %arg2: memref<1x20x18x4xf32, #tpu.memory_space<vmem>>, %arg3: memref<36x8xf32, #tpu.memory_space<vmem>>, %arg4: memref<1x8xf32, #tpu.memory_space<vmem>>, %arg5: memref<72x8xf32, #tpu.memory_space<vmem>>, %arg6: memref<1x8xf32, #tpu.memory_space<vmem>>, %arg7: memref<1x8x16x8xf32, #tpu.memory_space<vmem>>, %arg8: memref<10x18x8xf32, #tpu.memory_space<vmem>>) attributes {dimension_semantics = [#tpu.dimension_semantics<parallel>, #tpu.dimension_semantics<parallel>], iteration_bounds = array<i64: 2, 2>, scalar_prefetch = 0 : i64, scratch_operands = 1 : i64, tpu.core_type = #tpu.core_type<tc>, window_params = [{transform_indices = @transform_0, window_bounds = array<i64: 1, 20, 18, 4>}, {pipeline_mode = #tpu.pipeline_mode<synchronous>, transform_indices = @transform_1, window_bounds = array<i64: 36, 8>}, {pipeline_mode = #tpu.pipeline_mode<synchronous>, transform_indices = @transform_2, window_bounds = array<i64: 1, 8>}, {pipeline_mode = #tpu.pipeline_mode<synchronous>, transform_indices = @transform_3, window_bounds = array<i64: 72, 8>}, {pipeline_mode = #tpu.pipeline_mode<synchronous>, transform_indices = @transform_4, window_bounds = array<i64: 1, 8>}, {transform_indices = @transform_5, window_bounds = array<i64: 1, 8, 16, 8>}]} {
    %c8_i32 = arith.constant 8 : i32
    %0 = arith.muli %arg1, %c8_i32 : i32
    %1 = tpu.assume_multiple %0, 8 : i32
    %c0_i32 = arith.constant 0 : i32
    %2 = arith.addi %1, %c0_i32 : i32
    %c0 = arith.constant 0 : index
    %3 = arith.index_cast %2 : i32 to index
    %c0_0 = arith.constant 0 : index
    %c0_1 = arith.constant 0 : index
    %4 = vector.load %arg2[%c0, %3, %c0_0, %c0_1] : memref<1x20x18x4xf32, #tpu.memory_space<vmem>>, vector<1x10x16x4xf32>
    %5 = vector.shape_cast %4 : vector<1x10x16x4xf32> to vector<10x16x4xf32>
    %c0_i32_2 = arith.constant 0 : i32
    %6 = arith.addi %1, %c0_i32_2 : i32
    %c0_3 = arith.constant 0 : index
    %7 = arith.index_cast %6 : i32 to index
    %c1 = arith.constant 1 : index
    %c0_4 = arith.constant 0 : index
    %8 = vector.load %arg2[%c0_3, %7, %c1, %c0_4] : memref<1x20x18x4xf32, #tpu.memory_space<vmem>>, vector<1x10x16x4xf32>
    %9 = vector.shape_cast %8 : vector<1x10x16x4xf32> to vector<10x16x4xf32>
    %c0_i32_5 = arith.constant 0 : i32
    %10 = arith.addi %1, %c0_i32_5 : i32
    %c0_6 = arith.constant 0 : index
    %11 = arith.index_cast %10 : i32 to index
    %c2 = arith.constant 2 : index
    %c0_7 = arith.constant 0 : index
    %12 = vector.load %arg2[%c0_6, %11, %c2, %c0_7] : memref<1x20x18x4xf32, #tpu.memory_space<vmem>>, vector<1x10x16x4xf32>
    %13 = vector.shape_cast %12 : vector<1x10x16x4xf32> to vector<10x16x4xf32>
    %c1_i32 = arith.constant 1 : i32
    %14 = arith.addi %1, %c1_i32 : i32
    %c0_8 = arith.constant 0 : index
    %15 = arith.index_cast %14 : i32 to index
    %c0_9 = arith.constant 0 : index
    %c0_10 = arith.constant 0 : index
    %16 = vector.load %arg2[%c0_8, %15, %c0_9, %c0_10] : memref<1x20x18x4xf32, #tpu.memory_space<vmem>>, vector<1x10x16x4xf32>
    %17 = vector.shape_cast %16 : vector<1x10x16x4xf32> to vector<10x16x4xf32>
    %c1_i32_11 = arith.constant 1 : i32
    %18 = arith.addi %1, %c1_i32_11 : i32
    %c0_12 = arith.constant 0 : index
    %19 = arith.index_cast %18 : i32 to index
    %c1_13 = arith.constant 1 : index
    %c0_14 = arith.constant 0 : index
    %20 = vector.load %arg2[%c0_12, %19, %c1_13, %c0_14] : memref<1x20x18x4xf32, #tpu.memory_space<vmem>>, vector<1x10x16x4xf32>
    %21 = vector.shape_cast %20 : vector<1x10x16x4xf32> to vector<10x16x4xf32>
    %c1_i32_15 = arith.constant 1 : i32
    %22 = arith.addi %1, %c1_i32_15 : i32
    %c0_16 = arith.constant 0 : index
    %23 = arith.index_cast %22 : i32 to index
    %c2_17 = arith.constant 2 : index
    %c0_18 = arith.constant 0 : index
    %24 = vector.load %arg2[%c0_16, %23, %c2_17, %c0_18] : memref<1x20x18x4xf32, #tpu.memory_space<vmem>>, vector<1x10x16x4xf32>
    %25 = vector.shape_cast %24 : vector<1x10x16x4xf32> to vector<10x16x4xf32>
    %c2_i32 = arith.constant 2 : i32
    %26 = arith.addi %1, %c2_i32 : i32
    %c0_19 = arith.constant 0 : index
    %27 = arith.index_cast %26 : i32 to index
    %c0_20 = arith.constant 0 : index
    %c0_21 = arith.constant 0 : index
    %28 = vector.load %arg2[%c0_19, %27, %c0_20, %c0_21] : memref<1x20x18x4xf32, #tpu.memory_space<vmem>>, vector<1x10x16x4xf32>
    %29 = vector.shape_cast %28 : vector<1x10x16x4xf32> to vector<10x16x4xf32>
    %c2_i32_22 = arith.constant 2 : i32
    %30 = arith.addi %1, %c2_i32_22 : i32
    %c0_23 = arith.constant 0 : index
    %31 = arith.index_cast %30 : i32 to index
    %c1_24 = arith.constant 1 : index
    %c0_25 = arith.constant 0 : index
    %32 = vector.load %arg2[%c0_23, %31, %c1_24, %c0_25] : memref<1x20x18x4xf32, #tpu.memory_space<vmem>>, vector<1x10x16x4xf32>
    %33 = vector.shape_cast %32 : vector<1x10x16x4xf32> to vector<10x16x4xf32>
    %c2_i32_26 = arith.constant 2 : i32
    %34 = arith.addi %1, %c2_i32_26 : i32
    %c0_27 = arith.constant 0 : index
    %35 = arith.index_cast %34 : i32 to index
    %c2_28 = arith.constant 2 : index
    %c0_29 = arith.constant 0 : index
    %36 = vector.load %arg2[%c0_27, %35, %c2_28, %c0_29] : memref<1x20x18x4xf32, #tpu.memory_space<vmem>>, vector<1x10x16x4xf32>
    %37 = vector.shape_cast %36 : vector<1x10x16x4xf32> to vector<10x16x4xf32>
    %38 = tpu.concatenate %5, %9, %13, %17, %21, %25, %29, %33, %37 in 2 : vector<10x16x4xf32>, vector<10x16x4xf32>, vector<10x16x4xf32>, vector<10x16x4xf32>, vector<10x16x4xf32>, vector<10x16x4xf32>, vector<10x16x4xf32>, vector<10x16x4xf32>, vector<10x16x4xf32> -> vector<10x16x36xf32>
    %39 = vector.shape_cast %38 : vector<10x16x36xf32> to vector<160x36xf32>
    %c0_30 = arith.constant 0 : index
    %c0_31 = arith.constant 0 : index
    %40 = vector.load %arg3[%c0_30, %c0_31] : memref<36x8xf32, #tpu.memory_space<vmem>>, vector<36x8xf32>
    %cst = arith.constant dense<0.000000e+00> : vector<160x8xf32>
    %41 = tpu.matmul %39, %40, %cst {dimension_numbers = #tpu.dot_dimension_numbers<[1], [0], [0], [1], [0, 0, 1, 1], [], []>} : vector<160x36xf32>, vector<36x8xf32>, vector<160x8xf32> -> vector<160x8xf32>
    %c0_32 = arith.constant 0 : index
    %c0_33 = arith.constant 0 : index
    %42 = vector.load %arg4[%c0_32, %c0_33] : memref<1x8xf32, #tpu.memory_space<vmem>>, vector<1x8xf32>
    %43 = vector.broadcast %42 : vector<1x8xf32> to vector<160x8xf32>
    %44 = arith.addf %41, %43 : vector<160x8xf32>
    %cst_34 = arith.constant 2.000000e-01 : f32
    %45 = vector.broadcast %cst_34 : f32 to vector<160x8xf32>
    %46 = arith.mulf %45, %44 : vector<160x8xf32>
    %47 = arith.maximumf %44, %46 : vector<160x8xf32>
    %48 = vector.shape_cast %47 : vector<160x8xf32> to vector<10x16x8xf32>
    %c0_35 = arith.constant 0 : index
    %c1_36 = arith.constant 1 : index
    %c0_37 = arith.constant 0 : index
    %49 = vector.load %arg8[%c0_35, %c1_36, %c0_37] : memref<10x18x8xf32, #tpu.memory_space<vmem>>, vector<10x16x8xf32>
    tpu.vector_store %arg8[%c0_35, %c1_36, %c0_37], %48 {strides = array<i32>} : memref<10x18x8xf32, #tpu.memory_space<vmem>>, vector<10x16x8xf32>,
    %c0_i32_38 = arith.constant 0 : i32
    %50 = arith.cmpi eq, %arg1, %c0_i32_38 : i32
    %51 = arith.extui %50 : i1 to i32
    %c0_i32_39 = arith.constant 0 : i32
    %52 = arith.cmpi ne, %51, %c0_i32_39 : i32
    scf.if %52 {
      %cst_85 = arith.constant 0.000000e+00 : f32
      %82 = vector.broadcast %cst_85 : f32 to vector<1x18x8xf32>
      %c0_86 = arith.constant 0 : index
      %c0_87 = arith.constant 0 : index
      %c0_88 = arith.constant 0 : index
      %83 = vector.load %arg8[%c0_86, %c0_87, %c0_88] : memref<10x18x8xf32, #tpu.memory_space<vmem>>, vector<1x18x8xf32>
      tpu.vector_store %arg8[%c0_86, %c0_87, %c0_88], %82 {strides = array<i32>} : memref<10x18x8xf32, #tpu.memory_space<vmem>>, vector<1x18x8xf32>,
    } else {
    }
    %c1_i32_40 = arith.constant 1 : i32
    %53 = arith.cmpi eq, %arg1, %c1_i32_40 : i32
    %54 = arith.extui %53 : i1 to i32
    %c0_i32_41 = arith.constant 0 : i32
    %55 = arith.cmpi ne, %54, %c0_i32_41 : i32
    scf.if %55 {
      %cst_85 = arith.constant 0.000000e+00 : f32
      %82 = vector.broadcast %cst_85 : f32 to vector<1x18x8xf32>
      %c9 = arith.constant 9 : index
      %c0_86 = arith.constant 0 : index
      %c0_87 = arith.constant 0 : index
      %83 = vector.load %arg8[%c9, %c0_86, %c0_87] : memref<10x18x8xf32, #tpu.memory_space<vmem>>, vector<1x18x8xf32>
      tpu.vector_store %arg8[%c9, %c0_86, %c0_87], %82 {strides = array<i32>} : memref<10x18x8xf32, #tpu.memory_space<vmem>>, vector<1x18x8xf32>,
    } else {
    }
    %cst_42 = arith.constant 0.000000e+00 : f32
    %56 = vector.broadcast %cst_42 : f32 to vector<10x1x8xf32>
    %c0_43 = arith.constant 0 : index
    %c0_44 = arith.constant 0 : index
    %c0_45 = arith.constant 0 : index
    %57 = vector.load %arg8[%c0_43, %c0_44, %c0_45] : memref<10x18x8xf32, #tpu.memory_space<vmem>>, vector<10x1x8xf32>
    tpu.vector_store %arg8[%c0_43, %c0_44, %c0_45], %56 {strides = array<i32>} : memref<10x18x8xf32, #tpu.memory_space<vmem>>, vector<10x1x8xf32>,
    %c0_46 = arith.constant 0 : index
    %c17 = arith.constant 17 : index
    %c0_47 = arith.constant 0 : index
    %58 = vector.load %arg8[%c0_46, %c17, %c0_47] : memref<10x18x8xf32, #tpu.memory_space<vmem>>, vector<10x1x8xf32>
    tpu.vector_store %arg8[%c0_46, %c17, %c0_47], %56 {strides = array<i32>} : memref<10x18x8xf32, #tpu.memory_space<vmem>>, vector<10x1x8xf32>,
    %c0_48 = arith.constant 0 : index
    %c0_49 = arith.constant 0 : index
    %c0_50 = arith.constant 0 : index
    %59 = vector.load %arg8[%c0_48, %c0_49, %c0_50] : memref<10x18x8xf32, #tpu.memory_space<vmem>>, vector<8x16x8xf32>
    %c0_51 = arith.constant 0 : index
    %c1_52 = arith.constant 1 : index
    %c0_53 = arith.constant 0 : index
    %60 = vector.load %arg8[%c0_51, %c1_52, %c0_53] : memref<10x18x8xf32, #tpu.memory_space<vmem>>, vector<8x16x8xf32>
    %c0_54 = arith.constant 0 : index
    %c2_55 = arith.constant 2 : index
    %c0_56 = arith.constant 0 : index
    %61 = vector.load %arg8[%c0_54, %c2_55, %c0_56] : memref<10x18x8xf32, #tpu.memory_space<vmem>>, vector<8x16x8xf32>
    %c1_57 = arith.constant 1 : index
    %c0_58 = arith.constant 0 : index
    %c0_59 = arith.constant 0 : index
    %62 = vector.load %arg8[%c1_57, %c0_58, %c0_59] : memref<10x18x8xf32, #tpu.memory_space<vmem>>, vector<8x16x8xf32>
    %c1_60 = arith.constant 1 : index
    %c1_61 = arith.constant 1 : index
    %c0_62 = arith.constant 0 : index
    %63 = vector.load %arg8[%c1_60, %c1_61, %c0_62] : memref<10x18x8xf32, #tpu.memory_space<vmem>>, vector<8x16x8xf32>
    %c1_63 = arith.constant 1 : index
    %c2_64 = arith.constant 2 : index
    %c0_65 = arith.constant 0 : index
    %64 = vector.load %arg8[%c1_63, %c2_64, %c0_65] : memref<10x18x8xf32, #tpu.memory_space<vmem>>, vector<8x16x8xf32>
    %c2_66 = arith.constant 2 : index
    %c0_67 = arith.constant 0 : index
    %c0_68 = arith.constant 0 : index
    %65 = vector.load %arg8[%c2_66, %c0_67, %c0_68] : memref<10x18x8xf32, #tpu.memory_space<vmem>>, vector<8x16x8xf32>
    %c2_69 = arith.constant 2 : index
    %c1_70 = arith.constant 1 : index
    %c0_71 = arith.constant 0 : index
    %66 = vector.load %arg8[%c2_69, %c1_70, %c0_71] : memref<10x18x8xf32, #tpu.memory_space<vmem>>, vector<8x16x8xf32>
    %c2_72 = arith.constant 2 : index
    %c2_73 = arith.constant 2 : index
    %c0_74 = arith.constant 0 : index
    %67 = vector.load %arg8[%c2_72, %c2_73, %c0_74] : memref<10x18x8xf32, #tpu.memory_space<vmem>>, vector<8x16x8xf32>
    %68 = tpu.concatenate %59, %60, %61, %62, %63, %64, %65, %66, %67 in 2 : vector<8x16x8xf32>, vector<8x16x8xf32>, vector<8x16x8xf32>, vector<8x16x8xf32>, vector<8x16x8xf32>, vector<8x16x8xf32>, vector<8x16x8xf32>, vector<8x16x8xf32>, vector<8x16x8xf32> -> vector<8x16x72xf32>
    %69 = vector.shape_cast %68 : vector<8x16x72xf32> to vector<128x72xf32>
    %c0_75 = arith.constant 0 : index
    %c0_76 = arith.constant 0 : index
    %70 = vector.load %arg5[%c0_75, %c0_76] : memref<72x8xf32, #tpu.memory_space<vmem>>, vector<72x8xf32>
    %cst_77 = arith.constant dense<0.000000e+00> : vector<128x8xf32>
    %71 = tpu.matmul %69, %70, %cst_77 {dimension_numbers = #tpu.dot_dimension_numbers<[1], [0], [0], [1], [0, 0, 1, 1], [], []>} : vector<128x72xf32>, vector<72x8xf32>, vector<128x8xf32> -> vector<128x8xf32>
    %c0_78 = arith.constant 0 : index
    %c0_79 = arith.constant 0 : index
    %72 = vector.load %arg6[%c0_78, %c0_79] : memref<1x8xf32, #tpu.memory_space<vmem>>, vector<1x8xf32>
    %73 = vector.broadcast %72 : vector<1x8xf32> to vector<128x8xf32>
    %74 = arith.addf %71, %73 : vector<128x8xf32>
    %cst_80 = arith.constant 2.000000e-01 : f32
    %75 = vector.broadcast %cst_80 : f32 to vector<128x8xf32>
    %76 = arith.mulf %75, %74 : vector<128x8xf32>
    %77 = arith.maximumf %74, %76 : vector<128x8xf32>
    %78 = vector.shape_cast %77 : vector<128x8xf32> to vector<8x16x8xf32>
    %c0_81 = arith.constant 0 : index
    %c0_82 = arith.constant 0 : index
    %c0_83 = arith.constant 0 : index
    %c0_84 = arith.constant 0 : index
    %79 = vector.load %arg7[%c0_81, %c0_82, %c0_83, %c0_84] : memref<1x8x16x8xf32, #tpu.memory_space<vmem>>, vector<1x8x16x8xf32>
    %80 = vector.shape_cast %79 : vector<1x8x16x8xf32> to vector<8x16x8xf32>
    %81 = vector.shape_cast %78 : vector<8x16x8xf32> to vector<1x8x16x8xf32>
    tpu.vector_store %arg7[%c0_81, %c0_82, %c0_83, %c0_84], %81 {strides = array<i32>} : memref<1x8x16x8xf32, #tpu.memory_space<vmem>>, vector<1x8x16x8xf32>,
    return
  }
  func.func @transform_0(%arg0: i32, %arg1: i32) -> (i32, i32, i32, i32) {
    %c0_i32 = arith.constant 0 : i32
    %c0_i32_0 = arith.constant 0 : i32
    %c0_i32_1 = arith.constant 0 : i32
    %c0_i32_2 = arith.constant 0 : i32
    return %arg0, %c0_i32, %c0_i32_0, %c0_i32_1 : i32, i32, i32, i32
  }
  func.func @transform_1(%arg0: i32, %arg1: i32) -> (i32, i32) {
    %c0_i32 = arith.constant 0 : i32
    %c0_i32_0 = arith.constant 0 : i32
    %c0_i32_1 = arith.constant 0 : i32
    return %c0_i32, %c0_i32_0 : i32, i32
  }
  func.func @transform_2(%arg0: i32, %arg1: i32) -> (i32, i32) {
    %c0_i32 = arith.constant 0 : i32
    %c0_i32_0 = arith.constant 0 : i32
    %c0_i32_1 = arith.constant 0 : i32
    return %c0_i32, %c0_i32_0 : i32, i32
  }
  func.func @transform_3(%arg0: i32, %arg1: i32) -> (i32, i32) {
    %c0_i32 = arith.constant 0 : i32
    %c0_i32_0 = arith.constant 0 : i32
    %c0_i32_1 = arith.constant 0 : i32
    return %c0_i32, %c0_i32_0 : i32, i32
  }
  func.func @transform_4(%arg0: i32, %arg1: i32) -> (i32, i32) {
    %c0_i32 = arith.constant 0 : i32
    %c0_i32_0 = arith.constant 0 : i32
    %c0_i32_1 = arith.constant 0 : i32
    return %c0_i32, %c0_i32_0 : i32, i32
  }
  func.func @transform_5(%arg0: i32, %arg1: i32) -> (i32, i32, i32, i32) {
    %c0_i32 = arith.constant 0 : i32
    %c0_i32_0 = arith.constant 0 : i32
    %c0_i32_1 = arith.constant 0 : i32
    return %arg0, %arg1, %c0_i32, %c0_i32_0 : i32, i32, i32, i32
  }
}

</mosaic_0001>

<llo_original>
// kernel: tpu_custom_call.1
$region0: #{tpu_custom_call.1}
  #allocation0 [shape = 'u32[]', space=smem, size = 0x4, offset = 0x4, fixed_abs, tag = 'smem constant byte address 0x4 - core index']
  #allocation1 [shape = 'u32[72,128]{1,0:T(1,128)}', space=vmem, size = 0x9000, scoped, tag = 'internal scratch']
  #allocation2 [shape = 'f32[10,18,8]{2,1,0:T(8,128)}', space=vmem, size = 0x1e000, scoped, tag = 'scratch operand']
  %s0 = inlined_call_operand.vmem [shape: f32[2,20,18,4], index: 0, kind: input, shape index: {}]
  %s1 = inlined_call_operand.vmem [shape: f32[36,8], index: 1, kind: input, shape index: {}]
  %s2 = inlined_call_operand.vmem [shape: f32[1,8], index: 2, kind: input, shape index: {}]
  %s3 = inlined_call_operand.vmem [shape: f32[72,8], index: 3, kind: input, shape index: {}]
  %s4 = inlined_call_operand.vmem [shape: f32[1,8], index: 4, kind: input, shape index: {}]
  %s5 = inlined_call_operand.vmem [shape: f32[2,16,16,8], index: 5, kind: output, shape index: {}]
  %s6 = sld [smem:[#allocation0]]
  $region61: #{tpu_custom_call.1} parent=0
    _
  %s8 = ssub.s32 1, %s6
  %s9 = scalar_select 0, %s8, %s6
  loop: start=0, step=1, limit=6
  $region2: #{tpu_custom_call.1} parent=0 // loop_pre_header
    _
  $region3: #{tpu_custom_call.1} parent=0 // loop_header
    %s11 = sphi 0, %s15
    %p12 = scmp.ge.s32.totalorder %s11, 6
    %s18 = sphi 0, %s30
    %s19 = sphi 0, %s26
    %s20 = sphi 0, %s18
    %s21 = sphi 0, %s19
    %s22 = sphi 0, %s20
    %s23 = sphi 0, %s21
    %s33 = sphi 0, %s35
    %s36 = sphi 0, %s33
    %s37 = sphi 0, %s36
    %s53 = sphi 0, %s37
    %s57 = sphi 0, %s57
    %s59 = sphi 0, %s57
    %s60 = sphi 0, %s59
    %s74 = sphi 0, %s60
    %s78 = sphi 0, %s78
    %s80 = sphi 0, %s78
    %s81 = sphi 0, %s80
    %s95 = sphi 0, %s81
    %s99 = sphi 0, %s99
    %s101 = sphi 0, %s99
    %s102 = sphi 0, %s101
    %s116 = sphi 0, %s102
    %s120 = sphi 0, %s120
    %s122 = sphi 0, %s120
    %s123 = sphi 0, %s122
    %s137 = sphi 0, %s123
    %s145 = sphi 0, %s147
    %s148 = sphi 0, %s145
    %s149 = sphi 0, %s148
    %s165 = sphi 0, %s149
  $region4: #{tpu_custom_call.1} parent=0 // loop_header_branch
    %14 = sbr.rel (%p12) target = $region8
  $region5: #{tpu_custom_call.1} parent=0 // loop_body
    %s16 = ssub.s32 %s11, 1
    %s17 = ssub.s32 %s11, 2
    %s24 = sadd.s32 1, %s19
    %p25 = scmp.ge.s32.totalorder %s24, 2
    %s26 = scalar_select %p25, 0, %s24
    %s27 = sadd.s32 1, %s18
    %s28 = scalar_select %p25, %s27, %s18
    %p29 = scmp.ge.s32.totalorder %s28, 2
    %s30 = scalar_select %p29, 0, %s28
    %s31 = ssub.s32 %s18, %s30
    %p32 = scmp.eq.s32.totalorder %s31, 0
    %s34 = sadd.s32 %s33, 1
    %s35 = scalar_select %p32, %s33, %s34
    %p38 = pneg %p32
    %p39 = scmp.eq.s32.totalorder %s11, 3
    %p40 = por %p38, %p39
    %p41 = scmp.ne.s32.totalorder %s33, %s36
    %p42 = scmp.eq.s32.totalorder %s11, 0
    %p43 = por %p41, %p42
    %p44 = scmp.ne.s32.totalorder %s33, %s36
    %p45 = scmp.eq.s32.totalorder %s16, 3
    %p46 = por %p44, %p45
    %p47 = scmp.ne.s32.totalorder %s36, %s37
    %p48 = scmp.eq.s32.totalorder %s16, 0
    %p49 = por %p47, %p48
    %p50 = scmp.ne.s32.totalorder %s36, %s37
    %p51 = scmp.eq.s32.totalorder %s17, 3
    %p52 = por %p50, %p51
    %p54 = scmp.ne.s32.totalorder %s37, %s53
    %p55 = scmp.eq.s32.totalorder %s17, 0
    %p56 = por %p54, %p55
    %s58 = sadd.s32 %s57, 1
    %p61 = scmp.eq.s32.totalorder %s11, 3
    %p62 = scmp.ne.s32.totalorder %s57, %s59
    %p63 = scmp.eq.s32.totalorder %s11, 0
    %p64 = por %p62, %p63
    %p65 = scmp.ne.s32.totalorder %s57, %s59
    %p66 = scmp.eq.s32.totalorder %s16, 3
    %p67 = por %p65, %p66
    %p68 = scmp.ne.s32.totalorder %s59, %s60
    %p69 = scmp.eq.s32.totalorder %s16, 0
    %p70 = por %p68, %p69
    %p71 = scmp.ne.s32.totalorder %s59, %s60
    %p72 = scmp.eq.s32.totalorder %s17, 3
    %p73 = por %p71, %p72
    %p75 = scmp.ne.s32.totalorder %s60, %s74
    %p76 = scmp.eq.s32.totalorder %s17, 0
    %p77 = por %p75, %p76
    %s79 = sadd.s32 %s78, 1
    %p82 = scmp.eq.s32.totalorder %s11, 3
    %p83 = scmp.ne.s32.totalorder %s78, %s80
    %p84 = scmp.eq.s32.totalorder %s11, 0
    %p85 = por %p83, %p84
    %p86 = scmp.ne.s32.totalorder %s78, %s80
    %p87 = scmp.eq.s32.totalorder %s16, 3
    %p88 = por %p86, %p87
    %p89 = scmp.ne.s32.totalorder %s80, %s81
    %p90 = scmp.eq.s32.totalorder %s16, 0
    %p91 = por %p89, %p90
    %p92 = scmp.ne.s32.totalorder %s80, %s81
    %p93 = scmp.eq.s32.totalorder %s17, 3
    %p94 = por %p92, %p93
    %p96 = scmp.ne.s32.totalorder %s81, %s95
    %p97 = scmp.eq.s32.totalorder %s17, 0
    %p98 = por %p96, %p97
    %s100 = sadd.s32 %s99, 1
    %p103 = scmp.eq.s32.totalorder %s11, 3
    %p104 = scmp.ne.s32.totalorder %s99, %s101
    %p105 = scmp.eq.s32.totalorder %s11, 0
    %p106 = por %p104, %p105
    %p107 = scmp.ne.s32.totalorder %s99, %s101
    %p108 = scmp.eq.s32.totalorder %s16, 3
    %p109 = por %p107, %p108
    %p110 = scmp.ne.s32.totalorder %s101, %s102
    %p111 = scmp.eq.s32.totalorder %s16, 0
    %p112 = por %p110, %p111
    %p113 = scmp.ne.s32.totalorder %s101, %s102
    %p114 = scmp.eq.s32.totalorder %s17, 3
    %p115 = por %p113, %p114
    %p117 = scmp.ne.s32.totalorder %s102, %s116
    %p118 = scmp.eq.s32.totalorder %s17, 0
    %p119 = por %p117, %p118
    %s121 = sadd.s32 %s120, 1
    %p124 = scmp.eq.s32.totalorder %s11, 3
    %p125 = scmp.ne.s32.totalorder %s120, %s122
    %p126 = scmp.eq.s32.totalorder %s11, 0
    %p127 = por %p125, %p126
    %p128 = scmp.ne.s32.totalorder %s120, %s122
    %p129 = scmp.eq.s32.totalorder %s16, 3
    %p130 = por %p128, %p129
    %p131 = scmp.ne.s32.totalorder %s122, %s123
    %p132 = scmp.eq.s32.totalorder %s16, 0
    %p133 = por %p131, %p132
    %p134 = scmp.ne.s32.totalorder %s122, %s123
    %p135 = scmp.eq.s32.totalorder %s17, 3
    %p136 = por %p134, %p135
    %p138 = scmp.ne.s32.totalorder %s123, %s137
    %p139 = scmp.eq.s32.totalorder %s17, 0
    %p140 = por %p138, %p139
    %s141 = ssub.s32 %s18, %s30
    %s142 = ssub.s32 %s19, %s26
    %s143 = sor.u32 %s141, %s142
    %p144 = scmp.eq.s32.totalorder %s143, 0
    %s146 = sadd.s32 %s145, 1
    %s147 = scalar_select %p144, %s145, %s146
    %p150 = pneg %p144
    %p151 = scmp.eq.s32.totalorder %s11, 3
    %p152 = por %p150, %p151
    %p153 = scmp.ne.s32.totalorder %s145, %s148
    %p154 = scmp.eq.s32.totalorder %s11, 0
    %p155 = por %p153, %p154
    %p156 = scmp.ne.s32.totalorder %s145, %s148
    %p157 = scmp.eq.s32.totalorder %s16, 3
    %p158 = por %p156, %p157
    %p159 = scmp.ne.s32.totalorder %s148, %s149
    %p160 = scmp.eq.s32.totalorder %s16, 0
    %p161 = por %p159, %p160
    %p162 = scmp.ne.s32.totalorder %s148, %s149
    %p163 = scmp.eq.s32.totalorder %s17, 3
    %p164 = por %p162, %p163
    %p166 = scmp.ne.s32.totalorder %s149, %s165
    %p167 = scmp.eq.s32.totalorder %s17, 0
    %p168 = por %p166, %p167
    %p169 = scmp.le.s32.totalorder 1, %s11
    %p170 = scmp.lt.s32.totalorder %s11, 5
    %p171 = pnand %p169, %p170
    %p172 = pneg %p171
    // Predicated region
    $region9: #{tpu_custom_call.1} parent=5 // pred_check
      _
    $region10: #{tpu_custom_call.1} parent=5 // pred_check_branch
      %174 = sbr.rel (%p171) target = $region12
    $region11: #{tpu_custom_call.1} parent=5 // pred_region
      %s175 = ssub.s32 %s11, 1
      // Predicated region
      $region13: #{tpu_custom_call.1} parent=11 // pred_check
        %p176 = pneg %p70
      $region14: #{tpu_custom_call.1} parent=11 // pred_check_branch
        %178 = sbr.rel (%p176) target = $region16
      $region15: #{tpu_custom_call.1} parent=11 // pred_region
        _
      $region16: #{tpu_custom_call.1} parent=11 // pred_fallthru
        _
      // Predicated region
      $region17: #{tpu_custom_call.1} parent=11 // pred_check
        %p179 = pneg %p91
      $region18: #{tpu_custom_call.1} parent=11 // pred_check_branch
        %181 = sbr.rel (%p179) target = $region20
      $region19: #{tpu_custom_call.1} parent=11 // pred_region
        _
      $region20: #{tpu_custom_call.1} parent=11 // pred_fallthru
        _
      // Predicated region
      $region21: #{tpu_custom_call.1} parent=11 // pred_check
        %p182 = pneg %p112
      $region22: #{tpu_custom_call.1} parent=11 // pred_check_branch
        %184 = sbr.rel (%p182) target = $region24
      $region23: #{tpu_custom_call.1} parent=11 // pred_region
        _
      $region24: #{tpu_custom_call.1} parent=11 // pred_fallthru
        _
      // Predicated region
      $region25: #{tpu_custom_call.1} parent=11 // pred_check
        %p185 = pneg %p133
      $region26: #{tpu_custom_call.1} parent=11 // pred_check_branch
        %187 = sbr.rel (%p185) target = $region28
      $region27: #{tpu_custom_call.1} parent=11 // pred_region
        _
      $region28: #{tpu_custom_call.1} parent=11 // pred_fallthru
        _
    $region12: #{tpu_custom_call.1} parent=5 // pred_fallthru
      _
    %p188 = scmp.lt.s32.totalorder %s11, 4
    // Predicated region
    $region29: #{tpu_custom_call.1} parent=5 // pred_check
      %p189 = pneg %p188
    $region30: #{tpu_custom_call.1} parent=5 // pred_check_branch
      %191 = sbr.rel (%p189) target = $region32
    $region31: #{tpu_custom_call.1} parent=5 // pred_region
      // Predicated region
      $region33: #{tpu_custom_call.1} parent=31 // pred_check
        %p192 = pneg %p43
      $region34: #{tpu_custom_call.1} parent=31 // pred_check_branch
        %194 = sbr.rel (%p192) target = $region36
      $region35: #{tpu_custom_call.1} parent=31 // pred_region
        %p195 = scmp.lt.s32.totalorder %s18, 1
        %s196 = scalar_select %p195, %s18, 1
        %s197 = smul.addr %s196, 60
        %s198 = smul.addr %s197, 8
        %s199 = scalar_lea.vmem %s0, %s198
      $region36: #{tpu_custom_call.1} parent=31 // pred_fallthru
        _
    $region32: #{tpu_custom_call.1} parent=5 // pred_fallthru
      _
    %p200 = scmp.le.s32.totalorder 1, %s11
    %p201 = scmp.lt.s32.totalorder %s11, 5
    %p202 = pnand %p200, %p201
    %p203 = pneg %p202
    // Predicated region
    $region37: #{tpu_custom_call.1} parent=5 // pred_check
      _
    $region38: #{tpu_custom_call.1} parent=5 // pred_check_branch
      %205 = sbr.rel (%p202) target = $region40
    $region39: #{tpu_custom_call.1} parent=5 // pred_region
      %s206 = ssub.s32 %s11, 1
      %p207 = scmp.lt.s32.totalorder %s20, 1
      %s208 = scalar_select %p207, %s20, 1
      %s209 = smul.addr %s208, 60
      %s210 = smul.addr %s209, 8
      %s211 = scalar_lea.vmem %s0, %s210
      %p212 = pneg %p49
      %p213 = pneg %p46
      %p214 = pneg %p70
      %p215 = pneg %p67
      %p216 = pneg %p91
      %p217 = pneg %p88
      %p218 = pneg %p112
      %p219 = pneg %p109
      %p220 = pneg %p133
      %p221 = pneg %p130
      %p222 = pneg %p161
      %p223 = pneg %p158
      %s224 = smul.u32 8, %s21
      %p225 = scmp.lt.s32.totalorder %s20, 1
      %s226 = scalar_select %p225, %s20, 1
      %p227 = scmp.lt.s32.totalorder %s224, 15
      %s228 = scalar_select %p227, %s224, 15
      %s229 = smul.addr %s228, 2
      %s230 = smul.addr %s226, 32
      %s231 = sadd.s32 %s229, %s230
      %s232 = smul.addr %s231, 8
      %s233 = scalar_lea.vmem %s5, %s232
      %p234 = scmp.lt.s32.totalorder %s20, 1
      %s235 = scalar_select %p234, %s20, 1
      %s236 = smul.addr %s235, 60
      %s237 = smul.addr %s236, 8
      %s238 = scalar_lea.vmem %s0, %s237
      %s239 = smul.u32 8, %s21
      %p240 = scmp.lt.s32.totalorder %s20, 1
      %s241 = scalar_select %p240, %s20, 1
      %p242 = scmp.lt.s32.totalorder %s239, 15
      %s243 = scalar_select %p242, %s239, 15
      %s244 = smul.addr %s243, 2
      %s245 = smul.addr %s241, 32
      %s246 = sadd.s32 %s244, %s245
      %s247 = smul.addr %s246, 8
      %s248 = scalar_lea.vmem %s5, %s247
      %s249 = smul.u32 8, %s21
      %s250 = smul.u32 %s21, 8
      %s251 = smul.u32 %s250, 24
      %s252 = scalar_lea.vmem %s238, %s251
      %v253 = vld [vmem:[%s252] sm:$0xff]
      %v254 = vld [vmem:[%s252 + $0x8] sm:$0xff]
      %v255 = vld [vmem:[%s252 + $0x18] sm:$0xff]
      %v256 = vld [vmem:[%s252 + $0x20] sm:$0xff]
      %v257 = vld [vmem:[%s252 + $0x30] sm:$0xff]
      %v258 = vld [vmem:[%s252 + $0x38] sm:$0xff]
      %v259 = vld [vmem:[%s252 + $0x48] sm:$0xff]
      %v260 = vld [vmem:[%s252 + $0x50] sm:$0xff]
      %v261 = vld [vmem:[%s252 + $0x60] sm:$0xff]
      %v262 = vld [vmem:[%s252 + $0x68] sm:$0xff]
      %v263 = vld [vmem:[%s252 + $0x78] sm:$0xff]
      %v264 = vld [vmem:[%s252 + $0x80] sm:$0xff]
      %v265 = vld [vmem:[%s252 + $0x90] sm:$0xff]
      %v266 = vld [vmem:[%s252 + $0x98] sm:$0xff]
      %v267 = vld [vmem:[%s252 + $0xa8] sm:$0xff]
      %v268 = vld [vmem:[%s252 + $0xb0] sm:$0xff]
      %v269 = vld [vmem:[%s252 + $0xc0] sm:$0xff]
      %v270 = vld [vmem:[%s252 + $0xc8] sm:$0xff]
      %v271 = vld [vmem:[%s252 + $0xd8] sm:$0xff]
      %v272 = vld [vmem:[%s252 + $0xe0] sm:$0xff]
      %v273 = vld [vmem:[%s252 + $0x1] sm:$0xff]
      %v274 = vld [vmem:[%s252 + $0x9] sm:$0xff]
      %v275 = vld [vmem:[%s252 + $0x19] sm:$0xff]
      %v276 = vld [vmem:[%s252 + $0x21] sm:$0xff]
      %v277 = vld [vmem:[%s252 + $0x31] sm:$0xff]
      %v278 = vld [vmem:[%s252 + $0x39] sm:$0xff]
      %v279 = vld [vmem:[%s252 + $0x49] sm:$0xff]
      %v280 = vld [vmem:[%s252 + $0x51] sm:$0xff]
      %v281 = vld [vmem:[%s252 + $0x61] sm:$0xff]
      %v282 = vld [vmem:[%s252 + $0x69] sm:$0xff]
      %v283 = vld [vmem:[%s252 + $0x79] sm:$0xff]
      %v284 = vld [vmem:[%s252 + $0x81] sm:$0xff]
      %v285 = vld [vmem:[%s252 + $0x91] sm:$0xff]
      %v286 = vld [vmem:[%s252 + $0x99] sm:$0xff]
      %v287 = vld [vmem:[%s252 + $0xa9] sm:$0xff]
      %v288 = vld [vmem:[%s252 + $0xb1] sm:$0xff]
      %v289 = vld [vmem:[%s252 + $0xc1] sm:$0xff]
      %v290 = vld [vmem:[%s252 + $0xc9] sm:$0xff]
      %v291 = vld [vmem:[%s252 + $0xd9] sm:$0xff]
      %v292 = vld [vmem:[%s252 + $0xe1] sm:$0xff]
      %v293 = vld [vmem:[%s252 + $0x2] sm:$0xff]
      %v294 = vld [vmem:[%s252 + $0xa] sm:$0xff]
      %v295 = vld [vmem:[%s252 + $0x1a] sm:$0xff]
      %v296 = vld [vmem:[%s252 + $0x22] sm:$0xff]
      %v297 = vld [vmem:[%s252 + $0x32] sm:$0xff]
      %v298 = vld [vmem:[%s252 + $0x3a] sm:$0xff]
      %v299 = vld [vmem:[%s252 + $0x4a] sm:$0xff]
      %v300 = vld [vmem:[%s252 + $0x52] sm:$0xff]
      %v301 = vld [vmem:[%s252 + $0x62] sm:$0xff]
      %v302 = vld [vmem:[%s252 + $0x6a] sm:$0xff]
      %v303 = vld [vmem:[%s252 + $0x7a] sm:$0xff]
      %v304 = vld [vmem:[%s252 + $0x82] sm:$0xff]
      %v305 = vld [vmem:[%s252 + $0x92] sm:$0xff]
      %v306 = vld [vmem:[%s252 + $0x9a] sm:$0xff]
      %v307 = vld [vmem:[%s252 + $0xaa] sm:$0xff]
      %v308 = vld [vmem:[%s252 + $0xb2] sm:$0xff]
      %v309 = vld [vmem:[%s252 + $0xc2] sm:$0xff]
      %v310 = vld [vmem:[%s252 + $0xca] sm:$0xff]
      %v311 = vld [vmem:[%s252 + $0xda] sm:$0xff]
      %v312 = vld [vmem:[%s252 + $0xe2] sm:$0xff]
      %s313 = sadd.s32 %s250, 1
      %s314 = smul.u32 %s313, 24
      %s315 = scalar_lea.vmem %s238, %s314
      %v316 = vld [vmem:[%s315] sm:$0xff]
      %v317 = vld [vmem:[%s315 + $0x8] sm:$0xff]
      %v318 = vld [vmem:[%s315 + $0x18] sm:$0xff]
      %v319 = vld [vmem:[%s315 + $0x20] sm:$0xff]
      %v320 = vld [vmem:[%s315 + $0x30] sm:$0xff]
      %v321 = vld [vmem:[%s315 + $0x38] sm:$0xff]
      %v322 = vld [vmem:[%s315 + $0x48] sm:$0xff]
      %v323 = vld [vmem:[%s315 + $0x50] sm:$0xff]
      %v324 = vld [vmem:[%s315 + $0x60] sm:$0xff]
      %v325 = vld [vmem:[%s315 + $0x68] sm:$0xff]
      %v326 = vld [vmem:[%s315 + $0x78] sm:$0xff]
      %v327 = vld [vmem:[%s315 + $0x80] sm:$0xff]
      %v328 = vld [vmem:[%s315 + $0x90] sm:$0xff]
      %v329 = vld [vmem:[%s315 + $0x98] sm:$0xff]
      %v330 = vld [vmem:[%s315 + $0xa8] sm:$0xff]
      %v331 = vld [vmem:[%s315 + $0xb0] sm:$0xff]
      %v332 = vld [vmem:[%s315 + $0xc0] sm:$0xff]
      %v333 = vld [vmem:[%s315 + $0xc8] sm:$0xff]
      %v334 = vld [vmem:[%s315 + $0xd8] sm:$0xff]
      %v335 = vld [vmem:[%s315 + $0xe0] sm:$0xff]
      %v336 = vld [vmem:[%s315 + $0x1] sm:$0xff]
      %v337 = vld [vmem:[%s315 + $0x9] sm:$0xff]
      %v338 = vld [vmem:[%s315 + $0x19] sm:$0xff]
      %v339 = vld [vmem:[%s315 + $0x21] sm:$0xff]
      %v340 = vld [vmem:[%s315 + $0x31] sm:$0xff]
      %v341 = vld [vmem:[%s315 + $0x39] sm:$0xff]
      %v342 = vld [vmem:[%s315 + $0x49] sm:$0xff]
      %v343 = vld [vmem:[%s315 + $0x51] sm:$0xff]
      %v344 = vld [vmem:[%s315 + $0x61] sm:$0xff]
      %v345 = vld [vmem:[%s315 + $0x69] sm:$0xff]
      %v346 = vld [vmem:[%s315 + $0x79] sm:$0xff]
      %v347 = vld [vmem:[%s315 + $0x81] sm:$0xff]
      %v348 = vld [vmem:[%s315 + $0x91] sm:$0xff]
      %v349 = vld [vmem:[%s315 + $0x99] sm:$0xff]
      %v350 = vld [vmem:[%s315 + $0xa9] sm:$0xff]
      %v351 = vld [vmem:[%s315 + $0xb1] sm:$0xff]
      %v352 = vld [vmem:[%s315 + $0xc1] sm:$0xff]
      %v353 = vld [vmem:[%s315 + $0xc9] sm:$0xff]
      %v354 = vld [vmem:[%s315 + $0xd9] sm:$0xff]
      %v355 = vld [vmem:[%s315 + $0xe1] sm:$0xff]
      %v356 = vld [vmem:[%s315 + $0x2] sm:$0xff]
      %v357 = vld [vmem:[%s315 + $0xa] sm:$0xff]
      %v358 = vld [vmem:[%s315 + $0x1a] sm:$0xff]
      %v359 = vld [vmem:[%s315 + $0x22] sm:$0xff]
      %v360 = vld [vmem:[%s315 + $0x32] sm:$0xff]
      %v361 = vld [vmem:[%s315 + $0x3a] sm:$0xff]
      %v362 = vld [vmem:[%s315 + $0x4a] sm:$0xff]
      %v363 = vld [vmem:[%s315 + $0x52] sm:$0xff]
      %v364 = vld [vmem:[%s315 + $0x62] sm:$0xff]
      %v365 = vld [vmem:[%s315 + $0x6a] sm:$0xff]
      %v366 = vld [vmem:[%s315 + $0x7a] sm:$0xff]
      %v367 = vld [vmem:[%s315 + $0x82] sm:$0xff]
      %v368 = vld [vmem:[%s315 + $0x92] sm:$0xff]
      %v369 = vld [vmem:[%s315 + $0x9a] sm:$0xff]
      %v370 = vld [vmem:[%s315 + $0xaa] sm:$0xff]
      %v371 = vld [vmem:[%s315 + $0xb2] sm:$0xff]
      %v372 = vld [vmem:[%s315 + $0xc2] sm:$0xff]
      %v373 = vld [vmem:[%s315 + $0xca] sm:$0xff]
      %v374 = vld [vmem:[%s315 + $0xda] sm:$0xff]
      %v375 = vld [vmem:[%s315 + $0xe2] sm:$0xff]
      %s376 = sadd.s32 %s250, 2
      %s377 = smul.u32 %s376, 24
      %s378 = scalar_lea.vmem %s238, %s377
      %v379 = vld [vmem:[%s378] sm:$0xff]
      %v380 = vld [vmem:[%s378 + $0x8] sm:$0xff]
      %v381 = vld [vmem:[%s378 + $0x18] sm:$0xff]
      %v382 = vld [vmem:[%s378 + $0x20] sm:$0xff]
      %v383 = vld [vmem:[%s378 + $0x30] sm:$0xff]
      %v384 = vld [vmem:[%s378 + $0x38] sm:$0xff]
      %v385 = vld [vmem:[%s378 + $0x48] sm:$0xff]
      %v386 = vld [vmem:[%s378 + $0x50] sm:$0xff]
      %v387 = vld [vmem:[%s378 + $0x60] sm:$0xff]
      %v388 = vld [vmem:[%s378 + $0x68] sm:$0xff]
      %v389 = vld [vmem:[%s378 + $0x78] sm:$0xff]
      %v390 = vld [vmem:[%s378 + $0x80] sm:$0xff]
      %v391 = vld [vmem:[%s378 + $0x90] sm:$0xff]
      %v392 = vld [vmem:[%s378 + $0x98] sm:$0xff]
      %v393 = vld [vmem:[%s378 + $0xa8] sm:$0xff]
      %v394 = vld [vmem:[%s378 + $0xb0] sm:$0xff]
      %v395 = vld [vmem:[%s378 + $0xc0] sm:$0xff]
      %v396 = vld [vmem:[%s378 + $0xc8] sm:$0xff]
      %v397 = vld [vmem:[%s378 + $0xd8] sm:$0xff]
      %v398 = vld [vmem:[%s378 + $0xe0] sm:$0xff]
      %v399 = vld [vmem:[%s378 + $0x1] sm:$0xff]
      %v400 = vld [vmem:[%s378 + $0x9] sm:$0xff]
      %v401 = vld [vmem:[%s378 + $0x19] sm:$0xff]
      %v402 = vld [vmem:[%s378 + $0x21] sm:$0xff]
      %v403 = vld [vmem:[%s378 + $0x31] sm:$0xff]
      %v404 = vld [vmem:[%s378 + $0x39] sm:$0xff]
      %v405 = vld [vmem:[%s378 + $0x49] sm:$0xff]
      %v406 = vld [vmem:[%s378 + $0x51] sm:$0xff]
      %v407 = vld [vmem:[%s378 + $0x61] sm:$0xff]
      %v408 = vld [vmem:[%s378 + $0x69] sm:$0xff]
      %v409 = vld [vmem:[%s378 + $0x79] sm:$0xff]
      %v410 = vld [vmem:[%s378 + $0x81] sm:$0xff]
      %v411 = vld [vmem:[%s378 + $0x91] sm:$0xff]
      %v412 = vld [vmem:[%s378 + $0x99] sm:$0xff]
      %v413 = vld [vmem:[%s378 + $0xa9] sm:$0xff]
      %v414 = vld [vmem:[%s378 + $0xb1] sm:$0xff]
      %v415 = vld [vmem:[%s378 + $0xc1] sm:$0xff]
      %v416 = vld [vmem:[%s378 + $0xc9] sm:$0xff]
      %v417 = vld [vmem:[%s378 + $0xd9] sm:$0xff]
      %v418 = vld [vmem:[%s378 + $0xe1] sm:$0xff]
      %v419 = vld [vmem:[%s378 + $0x2] sm:$0xff]
      %v420 = vld [vmem:[%s378 + $0xa] sm:$0xff]
      %v421 = vld [vmem:[%s378 + $0x1a] sm:$0xff]
      %v422 = vld [vmem:[%s378 + $0x22] sm:$0xff]
      %v423 = vld [vmem:[%s378 + $0x32] sm:$0xff]
      %v424 = vld [vmem:[%s378 + $0x3a] sm:$0xff]
      %v425 = vld [vmem:[%s378 + $0x4a] sm:$0xff]
      %v426 = vld [vmem:[%s378 + $0x52] sm:$0xff]
      %v427 = vld [vmem:[%s378 + $0x62] sm:$0xff]
      %v428 = vld [vmem:[%s378 + $0x6a] sm:$0xff]
      %v429 = vld [vmem:[%s378 + $0x7a] sm:$0xff]
      %v430 = vld [vmem:[%s378 + $0x82] sm:$0xff]
      %v431 = vld [vmem:[%s378 + $0x92] sm:$0xff]
      %v432 = vld [vmem:[%s378 + $0x9a] sm:$0xff]
      %v433 = vld [vmem:[%s378 + $0xaa] sm:$0xff]
      %v434 = vld [vmem:[%s378 + $0xb2] sm:$0xff]
      %v435 = vld [vmem:[%s378 + $0xc2] sm:$0xff]
      %v436 = vld [vmem:[%s378 + $0xca] sm:$0xff]
      %v437 = vld [vmem:[%s378 + $0xda] sm:$0xff]
      %v438 = vld [vmem:[%s378 + $0xe2] sm:$0xff]
      %459 = vrot.lane.b32.xlu0 %v273, 4
      %v460 = vpop.permute.xlu0 %459
      %461 = vrot.lane.b32.xlu0 %v274, 4
      %v462 = vpop.permute.xlu0 %461
      %463 = vrot.lane.b32.xlu0 %v275, 4
      %v464 = vpop.permute.xlu0 %463
      %465 = vrot.lane.b32.xlu0 %v276, 4
      %v466 = vpop.permute.xlu0 %465
      %467 = vrot.lane.b32.xlu0 %v277, 4
      %v468 = vpop.permute.xlu0 %467
      %469 = vrot.lane.b32.xlu0 %v278, 4
      %v470 = vpop.permute.xlu0 %469
      %471 = vrot.lane.b32.xlu0 %v279, 4
      %v472 = vpop.permute.xlu0 %471
      %473 = vrot.lane.b32.xlu0 %v280, 4
      %v474 = vpop.permute.xlu0 %473
      %475 = vrot.lane.b32.xlu0 %v281, 4
      %v476 = vpop.permute.xlu0 %475
      %477 = vrot.lane.b32.xlu0 %v282, 4
      %v478 = vpop.permute.xlu0 %477
      %479 = vrot.lane.b32.xlu0 %v283, 4
      %v480 = vpop.permute.xlu0 %479
      %481 = vrot.lane.b32.xlu0 %v284, 4
      %v482 = vpop.permute.xlu0 %481
      %483 = vrot.lane.b32.xlu0 %v285, 4
      %v484 = vpop.permute.xlu0 %483
      %485 = vrot.lane.b32.xlu0 %v286, 4
      %v486 = vpop.permute.xlu0 %485
      %487 = vrot.lane.b32.xlu0 %v287, 4
      %v488 = vpop.permute.xlu0 %487
      %489 = vrot.lane.b32.xlu0 %v288, 4
      %v490 = vpop.permute.xlu0 %489
      %491 = vrot.lane.b32.xlu0 %v289, 4
      %v492 = vpop.permute.xlu0 %491
      %493 = vrot.lane.b32.xlu0 %v290, 4
      %v494 = vpop.permute.xlu0 %493
      %495 = vrot.lane.b32.xlu0 %v291, 4
      %v496 = vpop.permute.xlu0 %495
      %497 = vrot.lane.b32.xlu0 %v292, 4
      %v498 = vpop.permute.xlu0 %497
      %539 = vrot.lane.b32.xlu0 %v293, 8
      %v540 = vpop.permute.xlu0 %539
      %541 = vrot.lane.b32.xlu0 %v294, 8
      %v542 = vpop.permute.xlu0 %541
      %543 = vrot.lane.b32.xlu0 %v295, 8
      %v544 = vpop.permute.xlu0 %543
      %545 = vrot.lane.b32.xlu0 %v296, 8
      %v546 = vpop.permute.xlu0 %545
      %547 = vrot.lane.b32.xlu0 %v297, 8
      %v548 = vpop.permute.xlu0 %547
      %549 = vrot.lane.b32.xlu0 %v298, 8
      %v550 = vpop.permute.xlu0 %549
      %551 = vrot.lane.b32.xlu0 %v299, 8
      %v552 = vpop.permute.xlu0 %551
      %553 = vrot.lane.b32.xlu0 %v300, 8
      %v554 = vpop.permute.xlu0 %553
      %555 = vrot.lane.b32.xlu0 %v301, 8
      %v556 = vpop.permute.xlu0 %555
      %557 = vrot.lane.b32.xlu0 %v302, 8
      %v558 = vpop.permute.xlu0 %557
      %559 = vrot.lane.b32.xlu0 %v303, 8
      %v560 = vpop.permute.xlu0 %559
      %561 = vrot.lane.b32.xlu0 %v304, 8
      %v562 = vpop.permute.xlu0 %561
      %563 = vrot.lane.b32.xlu0 %v305, 8
      %v564 = vpop.permute.xlu0 %563
      %565 = vrot.lane.b32.xlu0 %v306, 8
      %v566 = vpop.permute.xlu0 %565
      %567 = vrot.lane.b32.xlu0 %v307, 8
      %v568 = vpop.permute.xlu0 %567
      %569 = vrot.lane.b32.xlu0 %v308, 8
      %v570 = vpop.permute.xlu0 %569
      %571 = vrot.lane.b32.xlu0 %v309, 8
      %v572 = vpop.permute.xlu0 %571
      %573 = vrot.lane.b32.xlu0 %v310, 8
      %v574 = vpop.permute.xlu0 %573
      %575 = vrot.lane.b32.xlu0 %v311, 8
      %v576 = vpop.permute.xlu0 %575
      %577 = vrot.lane.b32.xlu0 %v312, 8
      %v578 = vpop.permute.xlu0 %577
      %619 = vrot.lane.b32.xlu0 %v316, 12
      %v620 = vpop.permute.xlu0 %619
      %621 = vrot.lane.b32.xlu0 %v317, 12
      %v622 = vpop.permute.xlu0 %621
      %623 = vrot.lane.b32.xlu0 %v318, 12
      %v624 = vpop.permute.xlu0 %623
      %625 = vrot.lane.b32.xlu0 %v319, 12
      %v626 = vpop.permute.xlu0 %625
      %627 = vrot.lane.b32.xlu0 %v320, 12
      %v628 = vpop.permute.xlu0 %627
      %629 = vrot.lane.b32.xlu0 %v321, 12
      %v630 = vpop.permute.xlu0 %629
      %631 = vrot.lane.b32.xlu0 %v322, 12
      %v632 = vpop.permute.xlu0 %631
      %633 = vrot.lane.b32.xlu0 %v323, 12
      %v634 = vpop.permute.xlu0 %633
      %635 = vrot.lane.b32.xlu0 %v324, 12
      %v636 = vpop.permute.xlu0 %635
      %637 = vrot.lane.b32.xlu0 %v325, 12
      %v638 = vpop.permute.xlu0 %637
      %639 = vrot.lane.b32.xlu0 %v326, 12
      %v640 = vpop.permute.xlu0 %639
      %641 = vrot.lane.b32.xlu0 %v327, 12
      %v642 = vpop.permute.xlu0 %641
      %643 = vrot.lane.b32.xlu0 %v328, 12
      %v644 = vpop.permute.xlu0 %643
      %645 = vrot.lane.b32.xlu0 %v329, 12
      %v646 = vpop.permute.xlu0 %645
      %647 = vrot.lane.b32.xlu0 %v330, 12
      %v648 = vpop.permute.xlu0 %647
      %649 = vrot.lane.b32.xlu0 %v331, 12
      %v650 = vpop.permute.xlu0 %649
      %651 = vrot.lane.b32.xlu0 %v332, 12
      %v652 = vpop.permute.xlu0 %651
      %653 = vrot.lane.b32.xlu0 %v333, 12
      %v654 = vpop.permute.xlu0 %653
      %655 = vrot.lane.b32.xlu0 %v334, 12
      %v656 = vpop.permute.xlu0 %655
      %657 = vrot.lane.b32.xlu0 %v335, 12
      %v658 = vpop.permute.xlu0 %657
      %699 = vrot.lane.b32.xlu0 %v336, 16
      %v700 = vpop.permute.xlu0 %699
      %701 = vrot.lane.b32.xlu0 %v337, 16
      %v702 = vpop.permute.xlu0 %701
      %703 = vrot.lane.b32.xlu0 %v338, 16
      %v704 = vpop.permute.xlu0 %703
      %705 = vrot.lane.b32.xlu0 %v339, 16
      %v706 = vpop.permute.xlu0 %705
      %707 = vrot.lane.b32.xlu0 %v340, 16
      %v708 = vpop.permute.xlu0 %707
      %709 = vrot.lane.b32.xlu0 %v341, 16
      %v710 = vpop.permute.xlu0 %709
      %711 = vrot.lane.b32.xlu0 %v342, 16
      %v712 = vpop.permute.xlu0 %711
      %713 = vrot.lane.b32.xlu0 %v343, 16
      %v714 = vpop.permute.xlu0 %713
      %715 = vrot.lane.b32.xlu0 %v344, 16
      %v716 = vpop.permute.xlu0 %715
      %717 = vrot.lane.b32.xlu0 %v345, 16
      %v718 = vpop.permute.xlu0 %717
      %719 = vrot.lane.b32.xlu0 %v346, 16
      %v720 = vpop.permute.xlu0 %719
      %721 = vrot.lane.b32.xlu0 %v347, 16
      %v722 = vpop.permute.xlu0 %721
      %723 = vrot.lane.b32.xlu0 %v348, 16
      %v724 = vpop.permute.xlu0 %723
      %725 = vrot.lane.b32.xlu0 %v349, 16
      %v726 = vpop.permute.xlu0 %725
      %727 = vrot.lane.b32.xlu0 %v350, 16
      %v728 = vpop.permute.xlu0 %727
      %729 = vrot.lane.b32.xlu0 %v351, 16
      %v730 = vpop.permute.xlu0 %729
      %731 = vrot.lane.b32.xlu0 %v352, 16
      %v732 = vpop.permute.xlu0 %731
      %733 = vrot.lane.b32.xlu0 %v353, 16
      %v734 = vpop.permute.xlu0 %733
      %735 = vrot.lane.b32.xlu0 %v354, 16
      %v736 = vpop.permute.xlu0 %735
      %737 = vrot.lane.b32.xlu0 %v355, 16
      %v738 = vpop.permute.xlu0 %737
      %779 = vrot.lane.b32.xlu0 %v356, 20
      %v780 = vpop.permute.xlu0 %779
      %781 = vrot.lane.b32.xlu0 %v357, 20
      %v782 = vpop.permute.xlu0 %781
      %783 = vrot.lane.b32.xlu0 %v358, 20
      %v784 = vpop.permute.xlu0 %783
      %785 = vrot.lane.b32.xlu0 %v359, 20
      %v786 = vpop.permute.xlu0 %785
      %787 = vrot.lane.b32.xlu0 %v360, 20
      %v788 = vpop.permute.xlu0 %787
      %789 = vrot.lane.b32.xlu0 %v361, 20
      %v790 = vpop.permute.xlu0 %789
      %791 = vrot.lane.b32.xlu0 %v362, 20
      %v792 = vpop.permute.xlu0 %791
      %793 = vrot.lane.b32.xlu0 %v363, 20
      %v794 = vpop.permute.xlu0 %793
      %795 = vrot.lane.b32.xlu0 %v364, 20
      %v796 = vpop.permute.xlu0 %795
      %797 = vrot.lane.b32.xlu0 %v365, 20
      %v798 = vpop.permute.xlu0 %797
      %799 = vrot.lane.b32.xlu0 %v366, 20
      %v800 = vpop.permute.xlu0 %799
      %801 = vrot.lane.b32.xlu0 %v367, 20
      %v802 = vpop.permute.xlu0 %801
      %803 = vrot.lane.b32.xlu0 %v368, 20
      %v804 = vpop.permute.xlu0 %803
      %805 = vrot.lane.b32.xlu0 %v369, 20
      %v806 = vpop.permute.xlu0 %805
      %807 = vrot.lane.b32.xlu0 %v370, 20
      %v808 = vpop.permute.xlu0 %807
      %809 = vrot.lane.b32.xlu0 %v371, 20
      %v810 = vpop.permute.xlu0 %809
      %811 = vrot.lane.b32.xlu0 %v372, 20
      %v812 = vpop.permute.xlu0 %811
      %813 = vrot.lane.b32.xlu0 %v373, 20
      %v814 = vpop.permute.xlu0 %813
      %815 = vrot.lane.b32.xlu0 %v374, 20
      %v816 = vpop.permute.xlu0 %815
      %817 = vrot.lane.b32.xlu0 %v375, 20
      %v818 = vpop.permute.xlu0 %817
      %859 = vrot.lane.b32.xlu0 %v379, 24
      %v860 = vpop.permute.xlu0 %859
      %861 = vrot.lane.b32.xlu0 %v380, 24
      %v862 = vpop.permute.xlu0 %861
      %863 = vrot.lane.b32.xlu0 %v381, 24
      %v864 = vpop.permute.xlu0 %863
      %865 = vrot.lane.b32.xlu0 %v382, 24
      %v866 = vpop.permute.xlu0 %865
      %867 = vrot.lane.b32.xlu0 %v383, 24
      %v868 = vpop.permute.xlu0 %867
      %869 = vrot.lane.b32.xlu0 %v384, 24
      %v870 = vpop.permute.xlu0 %869
      %871 = vrot.lane.b32.xlu0 %v385, 24
      %v872 = vpop.permute.xlu0 %871
      %873 = vrot.lane.b32.xlu0 %v386, 24
      %v874 = vpop.permute.xlu0 %873
      %875 = vrot.lane.b32.xlu0 %v387, 24
      %v876 = vpop.permute.xlu0 %875
      %877 = vrot.lane.b32.xlu0 %v388, 24
      %v878 = vpop.permute.xlu0 %877
      %879 = vrot.lane.b32.xlu0 %v389, 24
      %v880 = vpop.permute.xlu0 %879
      %881 = vrot.lane.b32.xlu0 %v390, 24
      %v882 = vpop.permute.xlu0 %881
      %883 = vrot.lane.b32.xlu0 %v391, 24
      %v884 = vpop.permute.xlu0 %883
      %885 = vrot.lane.b32.xlu0 %v392, 24
      %v886 = vpop.permute.xlu0 %885
      %887 = vrot.lane.b32.xlu0 %v393, 24
      %v888 = vpop.permute.xlu0 %887
      %889 = vrot.lane.b32.xlu0 %v394, 24
      %v890 = vpop.permute.xlu0 %889
      %891 = vrot.lane.b32.xlu0 %v395, 24
      %v892 = vpop.permute.xlu0 %891
      %893 = vrot.lane.b32.xlu0 %v396, 24
      %v894 = vpop.permute.xlu0 %893
      %895 = vrot.lane.b32.xlu0 %v397, 24
      %v896 = vpop.permute.xlu0 %895
      %897 = vrot.lane.b32.xlu0 %v398, 24
      %v898 = vpop.permute.xlu0 %897
      %939 = vrot.lane.b32.xlu0 %v399, 28
      %v940 = vpop.permute.xlu0 %939
      %941 = vrot.lane.b32.xlu0 %v400, 28
      %v942 = vpop.permute.xlu0 %941
      %943 = vrot.lane.b32.xlu0 %v401, 28
      %v944 = vpop.permute.xlu0 %943
      %945 = vrot.lane.b32.xlu0 %v402, 28
      %v946 = vpop.permute.xlu0 %945
      %947 = vrot.lane.b32.xlu0 %v403, 28
      %v948 = vpop.permute.xlu0 %947
      %949 = vrot.lane.b32.xlu0 %v404, 28
      %v950 = vpop.permute.xlu0 %949
      %951 = vrot.lane.b32.xlu0 %v405, 28
      %v952 = vpop.permute.xlu0 %951
      %953 = vrot.lane.b32.xlu0 %v406, 28
      %v954 = vpop.permute.xlu0 %953
      %955 = vrot.lane.b32.xlu0 %v407, 28
      %v956 = vpop.permute.xlu0 %955
      %957 = vrot.lane.b32.xlu0 %v408, 28
      %v958 = vpop.permute.xlu0 %957
      %959 = vrot.lane.b32.xlu0 %v409, 28
      %v960 = vpop.permute.xlu0 %959
      %961 = vrot.lane.b32.xlu0 %v410, 28
      %v962 = vpop.permute.xlu0 %961
      %963 = vrot.lane.b32.xlu0 %v411, 28
      %v964 = vpop.permute.xlu0 %963
      %965 = vrot.lane.b32.xlu0 %v412, 28
      %v966 = vpop.permute.xlu0 %965
      %967 = vrot.lane.b32.xlu0 %v413, 28
      %v968 = vpop.permute.xlu0 %967
      %969 = vrot.lane.b32.xlu0 %v414, 28
      %v970 = vpop.permute.xlu0 %969
      %971 = vrot.lane.b32.xlu0 %v415, 28
      %v972 = vpop.permute.xlu0 %971
      %973 = vrot.lane.b32.xlu0 %v416, 28
      %v974 = vpop.permute.xlu0 %973
      %975 = vrot.lane.b32.xlu0 %v417, 28
      %v976 = vpop.permute.xlu0 %975
      %977 = vrot.lane.b32.xlu0 %v418, 28
      %v978 = vpop.permute.xlu0 %977
      %1019 = vrot.lane.b32.xlu0 %v419, 32
      %v1020 = vpop.permute.xlu0 %1019
      %1021 = vrot.lane.b32.xlu0 %v420, 32
      %v1022 = vpop.permute.xlu0 %1021
      %1023 = vrot.lane.b32.xlu0 %v421, 32
      %v1024 = vpop.permute.xlu0 %1023
      %1025 = vrot.lane.b32.xlu0 %v422, 32
      %v1026 = vpop.permute.xlu0 %1025
      %1027 = vrot.lane.b32.xlu0 %v423, 32
      %v1028 = vpop.permute.xlu0 %1027
      %1029 = vrot.lane.b32.xlu0 %v424, 32
      %v1030 = vpop.permute.xlu0 %1029
      %1031 = vrot.lane.b32.xlu0 %v425, 32
      %v1032 = vpop.permute.xlu0 %1031
      %1033 = vrot.lane.b32.xlu0 %v426, 32
      %v1034 = vpop.permute.xlu0 %1033
      %1035 = vrot.lane.b32.xlu0 %v427, 32
      %v1036 = vpop.permute.xlu0 %1035
      %1037 = vrot.lane.b32.xlu0 %v428, 32
      %v1038 = vpop.permute.xlu0 %1037
      %1039 = vrot.lane.b32.xlu0 %v429, 32
      %v1040 = vpop.permute.xlu0 %1039
      %1041 = vrot.lane.b32.xlu0 %v430, 32
      %v1042 = vpop.permute.xlu0 %1041
      %1043 = vrot.lane.b32.xlu0 %v431, 32
      %v1044 = vpop.permute.xlu0 %1043
      %1045 = vrot.lane.b32.xlu0 %v432, 32
      %v1046 = vpop.permute.xlu0 %1045
      %1047 = vrot.lane.b32.xlu0 %v433, 32
      %v1048 = vpop.permute.xlu0 %1047
      %1049 = vrot.lane.b32.xlu0 %v434, 32
      %v1050 = vpop.permute.xlu0 %1049
      %1051 = vrot.lane.b32.xlu0 %v435, 32
      %v1052 = vpop.permute.xlu0 %1051
      %1053 = vrot.lane.b32.xlu0 %v436, 32
      %v1054 = vpop.permute.xlu0 %1053
      %1055 = vrot.lane.b32.xlu0 %v437, 32
      %v1056 = vpop.permute.xlu0 %1055
      %1057 = vrot.lane.b32.xlu0 %v438, 32
      %v1058 = vpop.permute.xlu0 %1057
      %vm1079 = vcmask 31744
      %v1080 = vsel %vm1079, %v253, %v460
      %v1081 = vsel %vm1079, %v254, %v462
      %v1082 = vsel %vm1079, %v255, %v464
      %v1083 = vsel %vm1079, %v256, %v466
      %v1084 = vsel %vm1079, %v257, %v468
      %v1085 = vsel %vm1079, %v258, %v470
      %v1086 = vsel %vm1079, %v259, %v472
      %v1087 = vsel %vm1079, %v260, %v474
      %v1088 = vsel %vm1079, %v261, %v476
      %v1089 = vsel %vm1079, %v262, %v478
      %v1090 = vsel %vm1079, %v263, %v480
      %v1091 = vsel %vm1079, %v264, %v482
      %v1092 = vsel %vm1079, %v265, %v484
      %v1093 = vsel %vm1079, %v266, %v486
      %v1094 = vsel %vm1079, %v267, %v488
      %v1095 = vsel %vm1079, %v268, %v490
      %v1096 = vsel %vm1079, %v269, %v492
      %v1097 = vsel %vm1079, %v270, %v494
      %v1098 = vsel %vm1079, %v271, %v496
      %v1099 = vsel %vm1079, %v272, %v498
      %vm1100 = vcmask 64512
      %v1101 = vsel %vm1100, %v1080, %v540
      %v1102 = vsel %vm1100, %v1081, %v542
      %v1103 = vsel %vm1100, %v1082, %v544
      %v1104 = vsel %vm1100, %v1083, %v546
      %v1105 = vsel %vm1100, %v1084, %v548
      %v1106 = vsel %vm1100, %v1085, %v550
      %v1107 = vsel %vm1100, %v1086, %v552
      %v1108 = vsel %vm1100, %v1087, %v554
      %v1109 = vsel %vm1100, %v1088, %v556
      %v1110 = vsel %vm1100, %v1089, %v558
      %v1111 = vsel %vm1100, %v1090, %v560
      %v1112 = vsel %vm1100, %v1091, %v562
      %v1113 = vsel %vm1100, %v1092, %v564
      %v1114 = vsel %vm1100, %v1093, %v566
      %v1115 = vsel %vm1100, %v1094, %v568
      %v1116 = vsel %vm1100, %v1095, %v570
      %v1117 = vsel %vm1100, %v1096, %v572
      %v1118 = vsel %vm1100, %v1097, %v574
      %v1119 = vsel %vm1100, %v1098, %v576
      %v1120 = vsel %vm1100, %v1099, %v578
      %vm1121 = vcmask 97280
      %v1122 = vsel %vm1121, %v1101, %v620
      %v1123 = vsel %vm1121, %v1102, %v622
      %v1124 = vsel %vm1121, %v1103, %v624
      %v1125 = vsel %vm1121, %v1104, %v626
      %v1126 = vsel %vm1121, %v1105, %v628
      %v1127 = vsel %vm1121, %v1106, %v630
      %v1128 = vsel %vm1121, %v1107, %v632
      %v1129 = vsel %vm1121, %v1108, %v634
      %v1130 = vsel %vm1121, %v1109, %v636
      %v1131 = vsel %vm1121, %v1110, %v638
      %v1132 = vsel %vm1121, %v1111, %v640
      %v1133 = vsel %vm1121, %v1112, %v642
      %v1134 = vsel %vm1121, %v1113, %v644
      %v1135 = vsel %vm1121, %v1114, %v646
      %v1136 = vsel %vm1121, %v1115, %v648
      %v1137 = vsel %vm1121, %v1116, %v650
      %v1138 = vsel %vm1121, %v1117, %v652
      %v1139 = vsel %vm1121, %v1118, %v654
      %v1140 = vsel %vm1121, %v1119, %v656
      %v1141 = vsel %vm1121, %v1120, %v658
      %vm1142 = vcmask 130048
      %v1143 = vsel %vm1142, %v1122, %v700
      %v1144 = vsel %vm1142, %v1123, %v702
      %v1145 = vsel %vm1142, %v1124, %v704
      %v1146 = vsel %vm1142, %v1125, %v706
      %v1147 = vsel %vm1142, %v1126, %v708
      %v1148 = vsel %vm1142, %v1127, %v710
      %v1149 = vsel %vm1142, %v1128, %v712
      %v1150 = vsel %vm1142, %v1129, %v714
      %v1151 = vsel %vm1142, %v1130, %v716
      %v1152 = vsel %vm1142, %v1131, %v718
      %v1153 = vsel %vm1142, %v1132, %v720
      %v1154 = vsel %vm1142, %v1133, %v722
      %v1155 = vsel %vm1142, %v1134, %v724
      %v1156 = vsel %vm1142, %v1135, %v726
      %v1157 = vsel %vm1142, %v1136, %v728
      %v1158 = vsel %vm1142, %v1137, %v730
      %v1159 = vsel %vm1142, %v1138, %v732
      %v1160 = vsel %vm1142, %v1139, %v734
      %v1161 = vsel %vm1142, %v1140, %v736
      %v1162 = vsel %vm1142, %v1141, %v738
      %vm1163 = vcmask 162816
      %v1164 = vsel %vm1163, %v1143, %v780
      %v1165 = vsel %vm1163, %v1144, %v782
      %v1166 = vsel %vm1163, %v1145, %v784
      %v1167 = vsel %vm1163, %v1146, %v786
      %v1168 = vsel %vm1163, %v1147, %v788
      %v1169 = vsel %vm1163, %v1148, %v790
      %v1170 = vsel %vm1163, %v1149, %v792
      %v1171 = vsel %vm1163, %v1150, %v794
      %v1172 = vsel %vm1163, %v1151, %v796
      %v1173 = vsel %vm1163, %v1152, %v798
      %v1174 = vsel %vm1163, %v1153, %v800
      %v1175 = vsel %vm1163, %v1154, %v802
      %v1176 = vsel %vm1163, %v1155, %v804
      %v1177 = vsel %vm1163, %v1156, %v806
      %v1178 = vsel %vm1163, %v1157, %v808
      %v1179 = vsel %vm1163, %v1158, %v810
      %v1180 = vsel %vm1163, %v1159, %v812
      %v1181 = vsel %vm1163, %v1160, %v814
      %v1182 = vsel %vm1163, %v1161, %v816
      %v1183 = vsel %vm1163, %v1162, %v818
      %vm1184 = vcmask 195584
      %v1185 = vsel %vm1184, %v1164, %v860
      %v1186 = vsel %vm1184, %v1165, %v862
      %v1187 = vsel %vm1184, %v1166, %v864
      %v1188 = vsel %vm1184, %v1167, %v866
      %v1189 = vsel %vm1184, %v1168, %v868
      %v1190 = vsel %vm1184, %v1169, %v870
      %v1191 = vsel %vm1184, %v1170, %v872
      %v1192 = vsel %vm1184, %v1171, %v874
      %v1193 = vsel %vm1184, %v1172, %v876
      %v1194 = vsel %vm1184, %v1173, %v878
      %v1195 = vsel %vm1184, %v1174, %v880
      %v1196 = vsel %vm1184, %v1175, %v882
      %v1197 = vsel %vm1184, %v1176, %v884
      %v1198 = vsel %vm1184, %v1177, %v886
      %v1199 = vsel %vm1184, %v1178, %v888
      %v1200 = vsel %vm1184, %v1179, %v890
      %v1201 = vsel %vm1184, %v1180, %v892
      %v1202 = vsel %vm1184, %v1181, %v894
      %v1203 = vsel %vm1184, %v1182, %v896
      %v1204 = vsel %vm1184, %v1183, %v898
      %vm1205 = vcmask 228352
      %v1206 = vsel %vm1205, %v1185, %v940
      %v1207 = vsel %vm1205, %v1186, %v942
      %v1208 = vsel %vm1205, %v1187, %v944
      %v1209 = vsel %vm1205, %v1188, %v946
      %v1210 = vsel %vm1205, %v1189, %v948
      %v1211 = vsel %vm1205, %v1190, %v950
      %v1212 = vsel %vm1205, %v1191, %v952
      %v1213 = vsel %vm1205, %v1192, %v954
      %v1214 = vsel %vm1205, %v1193, %v956
      %v1215 = vsel %vm1205, %v1194, %v958
      %v1216 = vsel %vm1205, %v1195, %v960
      %v1217 = vsel %vm1205, %v1196, %v962
      %v1218 = vsel %vm1205, %v1197, %v964
      %v1219 = vsel %vm1205, %v1198, %v966
      %v1220 = vsel %vm1205, %v1199, %v968
      %v1221 = vsel %vm1205, %v1200, %v970
      %v1222 = vsel %vm1205, %v1201, %v972
      %v1223 = vsel %vm1205, %v1202, %v974
      %v1224 = vsel %vm1205, %v1203, %v976
      %v1225 = vsel %vm1205, %v1204, %v978
      %vm1226 = vcmask 261120
      %v1227 = vsel %vm1226, %v1206, %v1020
      %v1228 = vsel %vm1226, %v1207, %v1022
      %v1229 = vsel %vm1226, %v1208, %v1024
      %v1230 = vsel %vm1226, %v1209, %v1026
      %v1231 = vsel %vm1226, %v1210, %v1028
      %v1232 = vsel %vm1226, %v1211, %v1030
      %v1233 = vsel %vm1226, %v1212, %v1032
      %v1234 = vsel %vm1226, %v1213, %v1034
      %v1235 = vsel %vm1226, %v1214, %v1036
      %v1236 = vsel %vm1226, %v1215, %v1038
      %v1237 = vsel %vm1226, %v1216, %v1040
      %v1238 = vsel %vm1226, %v1217, %v1042
      %v1239 = vsel %vm1226, %v1218, %v1044
      %v1240 = vsel %vm1226, %v1219, %v1046
      %v1241 = vsel %vm1226, %v1220, %v1048
      %v1242 = vsel %vm1226, %v1221, %v1050
      %v1243 = vsel %vm1226, %v1222, %v1052
      %v1244 = vsel %vm1226, %v1223, %v1054
      %v1245 = vsel %vm1226, %v1224, %v1056
      %v1246 = vsel %vm1226, %v1225, %v1058
      %v1247 = vld [vmem:[%s1] sm:$0xff]
      %v1248 = vld [vmem:[%s1 + $0x8] sm:$0xff]
      %v1249 = vld [vmem:[%s1 + $0x10] sm:$0xff]
      %v1250 = vld [vmem:[%s1 + $0x18] sm:$0xff]
      %v1251 = vld [vmem:[%s1 + $0x20] sm:$0xf]
      %v1252 = vld [vmem:[%s2] sm:$0x1]
      %v1254 = vperm.slane %v1252, 0
      %vm1256 = vcmask 293888
      %v1258 = vsel %vm1256, %v1227, 0
      %v1261 = vsel %vm1256, %v1228, 0
      %v1264 = vsel %vm1256, %v1229, 0
      %v1267 = vsel %vm1256, %v1230, 0
      %v1270 = vsel %vm1256, %v1231, 0
      %v1273 = vsel %vm1256, %v1232, 0
      %v1276 = vsel %vm1256, %v1233, 0
      %v1279 = vsel %vm1256, %v1234, 0
      %v1282 = vsel %vm1256, %v1235, 0
      %v1285 = vsel %vm1256, %v1236, 0
      %v1288 = vsel %vm1256, %v1237, 0
      %v1291 = vsel %vm1256, %v1238, 0
      %v1294 = vsel %vm1256, %v1239, 0
      %v1297 = vsel %vm1256, %v1240, 0
      %v1300 = vsel %vm1256, %v1241, 0
      %v1303 = vsel %vm1256, %v1242, 0
      %v1306 = vsel %vm1256, %v1243, 0
      %v1309 = vsel %vm1256, %v1244, 0
      %v1312 = vsel %vm1256, %v1245, 0
      %v1315 = vsel %vm1256, %v1246, 0
      %vm1317 = vcmask 1043456
      %v1319 = vsel %vm1317, %v1251, 0
      %1321 = vmatpush.msra.mxu0 0.0
      %1322 = vmatpush.msra.mxu0 0.0
      %1323 = vmatpush.msra.mxu0 0.0
      %1324 = vmatpush.msra.mxu0 0.0
      %1325 = vmatpush.msra.mxu0 0.0
      %1326 = vmatpush.msra.mxu0 0.0
      %1327 = vmatpush.msra.mxu0 0.0
      %1328 = vmatpush.msra.mxu0 0.0
      %1329 = vmatpush.msra.mxu0 0.0
      %1330 = vmatpush.msra.mxu0 0.0
      %1331 = vmatpush.msra.mxu0 0.0
      %1332 = vmatpush.msra.mxu0 %v1319
      %1333 = vmatpush.msra.mxu0 %v1250
      %1334 = vmatpush.msra.mxu0 %v1249
      %1335 = vmatpush.msra.mxu0 %v1248
      %1336 = vmatpush.msra.mxu0 %v1247
      %1337 = vmatmul.f32.gmra.mxu0 %v1258
      %v1338 = vpop.f32.mrf.mxu0
      %v1339 = vadd.f32 %v1254, %v1338
      %1340 = vmatmul.f32.gmra.mxu0 %v1261
      %v1341 = vpop.f32.mrf.mxu0
      %v1342 = vadd.f32 %v1254, %v1341
      %1343 = vmatmul.f32.gmra.mxu0 %v1264
      %v1344 = vpop.f32.mrf.mxu0
      %v1345 = vadd.f32 %v1254, %v1344
      %1346 = vmatmul.f32.gmra.mxu0 %v1267
      %v1347 = vpop.f32.mrf.mxu0
      %v1348 = vadd.f32 %v1254, %v1347
      %1349 = vmatmul.f32.gmra.mxu0 %v1270
      %v1350 = vpop.f32.mrf.mxu0
      %v1351 = vadd.f32 %v1254, %v1350
      %1352 = vmatmul.f32.gmra.mxu0 %v1273
      %v1353 = vpop.f32.mrf.mxu0
      %v1354 = vadd.f32 %v1254, %v1353
      %1355 = vmatmul.f32.gmra.mxu0 %v1276
      %v1356 = vpop.f32.mrf.mxu0
      %v1357 = vadd.f32 %v1254, %v1356
      %1358 = vmatmul.f32.gmra.mxu0 %v1279
      %v1359 = vpop.f32.mrf.mxu0
      %v1360 = vadd.f32 %v1254, %v1359
      %1361 = vmatmul.f32.gmra.mxu0 %v1282
      %v1362 = vpop.f32.mrf.mxu0
      %v1363 = vadd.f32 %v1254, %v1362
      %1364 = vmatmul.f32.gmra.mxu0 %v1285
      %v1365 = vpop.f32.mrf.mxu0
      %v1366 = vadd.f32 %v1254, %v1365
      %1367 = vmatmul.f32.gmra.mxu0 %v1288
      %v1368 = vpop.f32.mrf.mxu0
      %v1369 = vadd.f32 %v1254, %v1368
      %1370 = vmatmul.f32.gmra.mxu0 %v1291
      %v1371 = vpop.f32.mrf.mxu0
      %v1372 = vadd.f32 %v1254, %v1371
      %1373 = vmatmul.f32.gmra.mxu0 %v1294
      %v1374 = vpop.f32.mrf.mxu0
      %v1375 = vadd.f32 %v1254, %v1374
      %1376 = vmatmul.f32.gmra.mxu0 %v1297
      %v1377 = vpop.f32.mrf.mxu0
      %v1378 = vadd.f32 %v1254, %v1377
      %1379 = vmatmul.f32.gmra.mxu0 %v1300
      %v1380 = vpop.f32.mrf.mxu0
      %v1381 = vadd.f32 %v1254, %v1380
      %1382 = vmatmul.f32.gmra.mxu0 %v1303
      %v1383 = vpop.f32.mrf.mxu0
      %v1384 = vadd.f32 %v1254, %v1383
      %1385 = vmatmul.f32.gmra.mxu0 %v1306
      %v1386 = vpop.f32.mrf.mxu0
      %v1387 = vadd.f32 %v1254, %v1386
      %1388 = vmatmul.f32.gmra.mxu0 %v1309
      %v1389 = vpop.f32.mrf.mxu0
      %v1390 = vadd.f32 %v1254, %v1389
      %1391 = vmatmul.f32.gmra.mxu0 %v1312
      %v1392 = vpop.f32.mrf.mxu0
      %v1393 = vadd.f32 %v1254, %v1392
      %1394 = vmatmul.f32.gmra.mxu0 %v1315
      %v1395 = vpop.f32.mrf.mxu0
      %v1396 = vadd.f32 %v1254, %v1395
      %1397 = vdwg.mxu0
      %v1398 = vmul.f32 %v1339, 0.2
      %v1399 = vmul.f32 %v1342, 0.2
      %v1400 = vmul.f32 %v1345, 0.2
      %v1401 = vmul.f32 %v1348, 0.2
      %v1402 = vmul.f32 %v1351, 0.2
      %v1403 = vmul.f32 %v1354, 0.2
      %v1404 = vmul.f32 %v1357, 0.2
      %v1405 = vmul.f32 %v1360, 0.2
      %v1406 = vmul.f32 %v1363, 0.2
      %v1407 = vmul.f32 %v1366, 0.2
      %v1408 = vmul.f32 %v1369, 0.2
      %v1409 = vmul.f32 %v1372, 0.2
      %v1410 = vmul.f32 %v1375, 0.2
      %v1411 = vmul.f32 %v1378, 0.2
      %v1412 = vmul.f32 %v1381, 0.2
      %v1413 = vmul.f32 %v1384, 0.2
      %v1414 = vmul.f32 %v1387, 0.2
      %v1415 = vmul.f32 %v1390, 0.2
      %v1416 = vmul.f32 %v1393, 0.2
      %v1417 = vmul.f32 %v1396, 0.2
      %v1418 = vmax.f32 %v1339, %v1398
      %v1419 = vmax.f32 %v1342, %v1399
      %v1420 = vmax.f32 %v1345, %v1400
      %v1421 = vmax.f32 %v1348, %v1401
      %v1422 = vmax.f32 %v1351, %v1402
      %v1423 = vmax.f32 %v1354, %v1403
      %v1424 = vmax.f32 %v1357, %v1404
      %v1425 = vmax.f32 %v1360, %v1405
      %v1426 = vmax.f32 %v1363, %v1406
      %v1427 = vmax.f32 %v1366, %v1407
      %v1428 = vmax.f32 %v1369, %v1408
      %v1429 = vmax.f32 %v1372, %v1409
      %v1430 = vmax.f32 %v1375, %v1410
      %v1431 = vmax.f32 %v1378, %v1411
      %v1432 = vmax.f32 %v1381, %v1412
      %v1433 = vmax.f32 %v1384, %v1413
      %v1434 = vmax.f32 %v1387, %v1414
      %v1435 = vmax.f32 %v1390, %v1415
      %v1436 = vmax.f32 %v1393, %v1416
      %v1437 = vmax.f32 %v1396, %v1417
      %1438 = vst.msk [vmem:[#allocation2 + $0x1] sm:$0xff] %vm1100, %v1418
      %1439 = vst.msk [vmem:[#allocation2 + $0x9] sm:$0xff] %vm1100, %v1419
      %1440 = vst.msk [vmem:[#allocation2 + $0x19] sm:$0xff] %vm1100, %v1420
      %1441 = vst.msk [vmem:[#allocation2 + $0x21] sm:$0xff] %vm1100, %v1421
      %1442 = vst.msk [vmem:[#allocation2 + $0x31] sm:$0xff] %vm1100, %v1422
      %1443 = vst.msk [vmem:[#allocation2 + $0x39] sm:$0xff] %vm1100, %v1423
      %1444 = vst.msk [vmem:[#allocation2 + $0x49] sm:$0xff] %vm1100, %v1424
      %1445 = vst.msk [vmem:[#allocation2 + $0x51] sm:$0xff] %vm1100, %v1425
      %1446 = vst.msk [vmem:[#allocation2 + $0x61] sm:$0xff] %vm1100, %v1426
      %1447 = vst.msk [vmem:[#allocation2 + $0x69] sm:$0xff] %vm1100, %v1427
      %1448 = vst.msk [vmem:[#allocation2 + $0x79] sm:$0xff] %vm1100, %v1428
      %1449 = vst.msk [vmem:[#allocation2 + $0x81] sm:$0xff] %vm1100, %v1429
      %1450 = vst.msk [vmem:[#allocation2 + $0x91] sm:$0xff] %vm1100, %v1430
      %1451 = vst.msk [vmem:[#allocation2 + $0x99] sm:$0xff] %vm1100, %v1431
      %1452 = vst.msk [vmem:[#allocation2 + $0xa9] sm:$0xff] %vm1100, %v1432
      %1453 = vst.msk [vmem:[#allocation2 + $0xb1] sm:$0xff] %vm1100, %v1433
      %1454 = vst.msk [vmem:[#allocation2 + $0xc1] sm:$0xff] %vm1100, %v1434
      %1455 = vst.msk [vmem:[#allocation2 + $0xc9] sm:$0xff] %vm1100, %v1435
      %1456 = vst.msk [vmem:[#allocation2 + $0xd9] sm:$0xff] %vm1100, %v1436
      %1457 = vst.msk [vmem:[#allocation2 + $0xe1] sm:$0xff] %vm1100, %v1437
      %p1458 = scmp.eq.s32.totalorder %s21, 0
      // Predicated region
      $region41: #{tpu_custom_call.1} parent=39 // pred_check
        %p1459 = pneg %p1458
      $region42: #{tpu_custom_call.1} parent=39 // pred_check_branch
        %1461 = sbr.rel (%p1459) target = $region44
      $region43: #{tpu_custom_call.1} parent=39 // pred_region
        %1462 = vst.msk [vmem:[#allocation2] sm:$0xff] %vm1100, 0.0
        %1463 = vst.msk [vmem:[#allocation2 + $0x8] sm:$0xff] %vm1100, 0.0
        %vm1464 = vcmask 58368
        %1465 = vst.msk [vmem:[#allocation2 + $0x10] sm:$0x3] %vm1464, 0.0
      $region44: #{tpu_custom_call.1} parent=39 // pred_fallthru
        _
      %p1466 = scmp.eq.s32.totalorder %s21, 1
      // Predicated region
      $region45: #{tpu_custom_call.1} parent=39 // pred_check
        %p1467 = pneg %p1466
      $region46: #{tpu_custom_call.1} parent=39 // pred_check_branch
        %1469 = sbr.rel (%p1467) target = $region48
      $region47: #{tpu_custom_call.1} parent=39 // pred_region
        %s1470 = scalar_lea.vmem [#allocation2], 216
        %1471 = vst.msk [vmem:[%s1470] sm:$0xff] %vm1100, 0.0
        %1472 = vst.msk [vmem:[%s1470 + $0x8] sm:$0xff] %vm1100, 0.0
        %vm1473 = vcmask 58368
        %1474 = vst.msk [vmem:[%s1470 + $0x10] sm:$0x3] %vm1473, 0.0
      $region48: #{tpu_custom_call.1} parent=39 // pred_fallthru
        _
      %vm1475 = vcmask 57344
      %1476 = vst.msk [vmem:[#allocation2] sm:$0x1] %vm1475, 0.0
      %1477 = vst.msk [vmem:[#allocation2 + $0x18] sm:$0x1] %vm1475, 0.0
      %1478 = vst.msk [vmem:[#allocation2 + $0x30] sm:$0x1] %vm1475, 0.0
      %1479 = vst.msk [vmem:[#allocation2 + $0x48] sm:$0x1] %vm1475, 0.0
      %1480 = vst.msk [vmem:[#allocation2 + $0x60] sm:$0x1] %vm1475, 0.0
      %1481 = vst.msk [vmem:[#allocation2 + $0x78] sm:$0x1] %vm1475, 0.0
      %1482 = vst.msk [vmem:[#allocation2 + $0x90] sm:$0x1] %vm1475, 0.0
      %1483 = vst.msk [vmem:[#allocation2 + $0xa8] sm:$0x1] %vm1475, 0.0
      %1484 = vst.msk [vmem:[#allocation2 + $0xc0] sm:$0x1] %vm1475, 0.0
      %1485 = vst.msk [vmem:[#allocation2 + $0xd8] sm:$0x1] %vm1475, 0.0
      %1486 = vst.msk [vmem:[#allocation2 + $0x11] sm:$0x1] %vm1475, 0.0
      %1487 = vst.msk [vmem:[#allocation2 + $0x29] sm:$0x1] %vm1475, 0.0
      %1488 = vst.msk [vmem:[#allocation2 + $0x41] sm:$0x1] %vm1475, 0.0
      %1489 = vst.msk [vmem:[#allocation2 + $0x59] sm:$0x1] %vm1475, 0.0
      %1490 = vst.msk [vmem:[#allocation2 + $0x71] sm:$0x1] %vm1475, 0.0
      %1491 = vst.msk [vmem:[#allocation2 + $0x89] sm:$0x1] %vm1475, 0.0
      %1492 = vst.msk [vmem:[#allocation2 + $0xa1] sm:$0x1] %vm1475, 0.0
      %1493 = vst.msk [vmem:[#allocation2 + $0xb9] sm:$0x1] %vm1475, 0.0
      %1494 = vst.msk [vmem:[#allocation2 + $0xd1] sm:$0x1] %vm1475, 0.0
      %1495 = vst.msk [vmem:[#allocation2 + $0xe9] sm:$0x1] %vm1475, 0.0
      %v1496 = vld [vmem:[#allocation2] sm:$0xff]
      %v1497 = vld [vmem:[#allocation2 + $0x8] sm:$0xff]
      %v1498 = vld [vmem:[#allocation2 + $0x18] sm:$0xff]
      %v1499 = vld [vmem:[#allocation2 + $0x20] sm:$0xff]
      %v1500 = vld [vmem:[#allocation2 + $0x30] sm:$0xff]
      %v1501 = vld [vmem:[#allocation2 + $0x38] sm:$0xff]
      %v1502 = vld [vmem:[#allocation2 + $0x48] sm:$0xff]
      %v1503 = vld [vmem:[#allocation2 + $0x50] sm:$0xff]
      %v1504 = vld [vmem:[#allocation2 + $0x60] sm:$0xff]
      %v1505 = vld [vmem:[#allocation2 + $0x68] sm:$0xff]
      %v1506 = vld [vmem:[#allocation2 + $0x78] sm:$0xff]
      %v1507 = vld [vmem:[#allocation2 + $0x80] sm:$0xff]
      %v1508 = vld [vmem:[#allocation2 + $0x90] sm:$0xff]
      %v1509 = vld [vmem:[#allocation2 + $0x98] sm:$0xff]
      %v1510 = vld [vmem:[#allocation2 + $0xa8] sm:$0xff]
      %v1511 = vld [vmem:[#allocation2 + $0xb0] sm:$0xff]
      %v1512 = vld [vmem:[#allocation2 + $0x1] sm:$0xff]
      %v1513 = vld [vmem:[#allocation2 + $0x9] sm:$0xff]
      %v1514 = vld [vmem:[#allocation2 + $0x19] sm:$0xff]
      %v1515 = vld [vmem:[#allocation2 + $0x21] sm:$0xff]
      %v1516 = vld [vmem:[#allocation2 + $0x31] sm:$0xff]
      %v1517 = vld [vmem:[#allocation2 + $0x39] sm:$0xff]
      %v1518 = vld [vmem:[#allocation2 + $0x49] sm:$0xff]
      %v1519 = vld [vmem:[#allocation2 + $0x51] sm:$0xff]
      %v1520 = vld [vmem:[#allocation2 + $0x61] sm:$0xff]
      %v1521 = vld [vmem:[#allocation2 + $0x69] sm:$0xff]
      %v1522 = vld [vmem:[#allocation2 + $0x79] sm:$0xff]
      %v1523 = vld [vmem:[#allocation2 + $0x81] sm:$0xff]
      %v1524 = vld [vmem:[#allocation2 + $0x91] sm:$0xff]
      %v1525 = vld [vmem:[#allocation2 + $0x99] sm:$0xff]
      %v1526 = vld [vmem:[#allocation2 + $0xa9] sm:$0xff]
      %v1527 = vld [vmem:[#allocation2 + $0xb1] sm:$0xff]
      %v1528 = vld [vmem:[#allocation2 + $0x2] sm:$0xff]
      %v1529 = vld [vmem:[#allocation2 + $0xa] sm:$0xff]
      %v1530 = vld [vmem:[#allocation2 + $0x1a] sm:$0xff]
      %v1531 = vld [vmem:[#allocation2 + $0x22] sm:$0xff]
      %v1532 = vld [vmem:[#allocation2 + $0x32] sm:$0xff]
      %v1533 = vld [vmem:[#allocation2 + $0x3a] sm:$0xff]
      %v1534 = vld [vmem:[#allocation2 + $0x4a] sm:$0xff]
      %v1535 = vld [vmem:[#allocation2 + $0x52] sm:$0xff]
      %v1536 = vld [vmem:[#allocation2 + $0x62] sm:$0xff]
      %v1537 = vld [vmem:[#allocation2 + $0x6a] sm:$0xff]
      %v1538 = vld [vmem:[#allocation2 + $0x7a] sm:$0xff]
      %v1539 = vld [vmem:[#allocation2 + $0x82] sm:$0xff]
      %v1540 = vld [vmem:[#allocation2 + $0x92] sm:$0xff]
      %v1541 = vld [vmem:[#allocation2 + $0x9a] sm:$0xff]
      %v1542 = vld [vmem:[#allocation2 + $0xaa] sm:$0xff]
      %v1543 = vld [vmem:[#allocation2 + $0xb2] sm:$0xff]
      %s1544 = scalar_lea.vmem [#allocation2], 24
      %v1545 = vld [vmem:[%s1544] sm:$0xff]
      %v1546 = vld [vmem:[%s1544 + $0x8] sm:$0xff]
      %v1547 = vld [vmem:[%s1544 + $0x18] sm:$0xff]
      %v1548 = vld [vmem:[%s1544 + $0x20] sm:$0xff]
      %v1549 = vld [vmem:[%s1544 + $0x30] sm:$0xff]
      %v1550 = vld [vmem:[%s1544 + $0x38] sm:$0xff]
      %v1551 = vld [vmem:[%s1544 + $0x48] sm:$0xff]
      %v1552 = vld [vmem:[%s1544 + $0x50] sm:$0xff]
      %v1553 = vld [vmem:[%s1544 + $0x60] sm:$0xff]
      %v1554 = vld [vmem:[%s1544 + $0x68] sm:$0xff]
      %v1555 = vld [vmem:[%s1544 + $0x78] sm:$0xff]
      %v1556 = vld [vmem:[%s1544 + $0x80] sm:$0xff]
      %v1557 = vld [vmem:[%s1544 + $0x90] sm:$0xff]
      %v1558 = vld [vmem:[%s1544 + $0x98] sm:$0xff]
      %v1559 = vld [vmem:[%s1544 + $0xa8] sm:$0xff]
      %v1560 = vld [vmem:[%s1544 + $0xb0] sm:$0xff]
      %v1561 = vld [vmem:[%s1544 + $0x1] sm:$0xff]
      %v1562 = vld [vmem:[%s1544 + $0x9] sm:$0xff]
      %v1563 = vld [vmem:[%s1544 + $0x19] sm:$0xff]
      %v1564 = vld [vmem:[%s1544 + $0x21] sm:$0xff]
      %v1565 = vld [vmem:[%s1544 + $0x31] sm:$0xff]
      %v1566 = vld [vmem:[%s1544 + $0x39] sm:$0xff]
      %v1567 = vld [vmem:[%s1544 + $0x49] sm:$0xff]
      %v1568 = vld [vmem:[%s1544 + $0x51] sm:$0xff]
      %v1569 = vld [vmem:[%s1544 + $0x61] sm:$0xff]
      %v1570 = vld [vmem:[%s1544 + $0x69] sm:$0xff]
      %v1571 = vld [vmem:[%s1544 + $0x79] sm:$0xff]
      %v1572 = vld [vmem:[%s1544 + $0x81] sm:$0xff]
      %v1573 = vld [vmem:[%s1544 + $0x91] sm:$0xff]
      %v1574 = vld [vmem:[%s1544 + $0x99] sm:$0xff]
      %v1575 = vld [vmem:[%s1544 + $0xa9] sm:$0xff]
      %v1576 = vld [vmem:[%s1544 + $0xb1] sm:$0xff]
      %v1577 = vld [vmem:[%s1544 + $0x2] sm:$0xff]
      %v1578 = vld [vmem:[%s1544 + $0xa] sm:$0xff]
      %v1579 = vld [vmem:[%s1544 + $0x1a] sm:$0xff]
      %v1580 = vld [vmem:[%s1544 + $0x22] sm:$0xff]
      %v1581 = vld [vmem:[%s1544 + $0x32] sm:$0xff]
      %v1582 = vld [vmem:[%s1544 + $0x3a] sm:$0xff]
      %v1583 = vld [vmem:[%s1544 + $0x4a] sm:$0xff]
      %v1584 = vld [vmem:[%s1544 + $0x52] sm:$0xff]
      %v1585 = vld [vmem:[%s1544 + $0x62] sm:$0xff]
      %v1586 = vld [vmem:[%s1544 + $0x6a] sm:$0xff]
      %v1587 = vld [vmem:[%s1544 + $0x7a] sm:$0xff]
      %v1588 = vld [vmem:[%s1544 + $0x82] sm:$0xff]
      %v1589 = vld [vmem:[%s1544 + $0x92] sm:$0xff]
      %v1590 = vld [vmem:[%s1544 + $0x9a] sm:$0xff]
      %v1591 = vld [vmem:[%s1544 + $0xaa] sm:$0xff]
      %v1592 = vld [vmem:[%s1544 + $0xb2] sm:$0xff]
      %s1593 = scalar_lea.vmem [#allocation2], 48
      %v1594 = vld [vmem:[%s1593] sm:$0xff]
      %v1595 = vld [vmem:[%s1593 + $0x8] sm:$0xff]
      %v1596 = vld [vmem:[%s1593 + $0x18] sm:$0xff]
      %v1597 = vld [vmem:[%s1593 + $0x20] sm:$0xff]
      %v1598 = vld [vmem:[%s1593 + $0x30] sm:$0xff]
      %v1599 = vld [vmem:[%s1593 + $0x38] sm:$0xff]
      %v1600 = vld [vmem:[%s1593 + $0x48] sm:$0xff]
      %v1601 = vld [vmem:[%s1593 + $0x50] sm:$0xff]
      %v1602 = vld [vmem:[%s1593 + $0x60] sm:$0xff]
      %v1603 = vld [vmem:[%s1593 + $0x68] sm:$0xff]
      %v1604 = vld [vmem:[%s1593 + $0x78] sm:$0xff]
      %v1605 = vld [vmem:[%s1593 + $0x80] sm:$0xff]
      %v1606 = vld [vmem:[%s1593 + $0x90] sm:$0xff]
      %v1607 = vld [vmem:[%s1593 + $0x98] sm:$0xff]
      %v1608 = vld [vmem:[%s1593 + $0xa8] sm:$0xff]
      %v1609 = vld [vmem:[%s1593 + $0xb0] sm:$0xff]
      %v1610 = vld [vmem:[%s1593 + $0x1] sm:$0xff]
      %v1611 = vld [vmem:[%s1593 + $0x9] sm:$0xff]
      %v1612 = vld [vmem:[%s1593 + $0x19] sm:$0xff]
      %v1613 = vld [vmem:[%s1593 + $0x21] sm:$0xff]
      %v1614 = vld [vmem:[%s1593 + $0x31] sm:$0xff]
      %v1615 = vld [vmem:[%s1593 + $0x39] sm:$0xff]
      %v1616 = vld [vmem:[%s1593 + $0x49] sm:$0xff]
      %v1617 = vld [vmem:[%s1593 + $0x51] sm:$0xff]
      %v1618 = vld [vmem:[%s1593 + $0x61] sm:$0xff]
      %v1619 = vld [vmem:[%s1593 + $0x69] sm:$0xff]
      %v1620 = vld [vmem:[%s1593 + $0x79] sm:$0xff]
      %v1621 = vld [vmem:[%s1593 + $0x81] sm:$0xff]
      %v1622 = vld [vmem:[%s1593 + $0x91] sm:$0xff]
      %v1623 = vld [vmem:[%s1593 + $0x99] sm:$0xff]
      %v1624 = vld [vmem:[%s1593 + $0xa9] sm:$0xff]
      %v1625 = vld [vmem:[%s1593 + $0xb1] sm:$0xff]
      %v1626 = vld [vmem:[%s1593 + $0x2] sm:$0xff]
      %v1627 = vld [vmem:[%s1593 + $0xa] sm:$0xff]
      %v1628 = vld [vmem:[%s1593 + $0x1a] sm:$0xff]
      %v1629 = vld [vmem:[%s1593 + $0x22] sm:$0xff]
      %v1630 = vld [vmem:[%s1593 + $0x32] sm:$0xff]
      %v1631 = vld [vmem:[%s1593 + $0x3a] sm:$0xff]
      %v1632 = vld [vmem:[%s1593 + $0x4a] sm:$0xff]
      %v1633 = vld [vmem:[%s1593 + $0x52] sm:$0xff]
      %v1634 = vld [vmem:[%s1593 + $0x62] sm:$0xff]
      %v1635 = vld [vmem:[%s1593 + $0x6a] sm:$0xff]
      %v1636 = vld [vmem:[%s1593 + $0x7a] sm:$0xff]
      %v1637 = vld [vmem:[%s1593 + $0x82] sm:$0xff]
      %v1638 = vld [vmem:[%s1593 + $0x92] sm:$0xff]
      %v1639 = vld [vmem:[%s1593 + $0x9a] sm:$0xff]
      %v1640 = vld [vmem:[%s1593 + $0xaa] sm:$0xff]
      %v1641 = vld [vmem:[%s1593 + $0xb2] sm:$0xff]
      %1658 = vrot.lane.b32.xlu0 %v1512, 8
      %v1659 = vpop.permute.xlu0 %1658
      %1660 = vrot.lane.b32.xlu0 %v1513, 8
      %v1661 = vpop.permute.xlu0 %1660
      %1662 = vrot.lane.b32.xlu0 %v1514, 8
      %v1663 = vpop.permute.xlu0 %1662
      %1664 = vrot.lane.b32.xlu0 %v1515, 8
      %v1665 = vpop.permute.xlu0 %1664
      %1666 = vrot.lane.b32.xlu0 %v1516, 8
      %v1667 = vpop.permute.xlu0 %1666
      %1668 = vrot.lane.b32.xlu0 %v1517, 8
      %v1669 = vpop.permute.xlu0 %1668
      %1670 = vrot.lane.b32.xlu0 %v1518, 8
      %v1671 = vpop.permute.xlu0 %1670
      %1672 = vrot.lane.b32.xlu0 %v1519, 8
      %v1673 = vpop.permute.xlu0 %1672
      %1674 = vrot.lane.b32.xlu0 %v1520, 8
      %v1675 = vpop.permute.xlu0 %1674
      %1676 = vrot.lane.b32.xlu0 %v1521, 8
      %v1677 = vpop.permute.xlu0 %1676
      %1678 = vrot.lane.b32.xlu0 %v1522, 8
      %v1679 = vpop.permute.xlu0 %1678
      %1680 = vrot.lane.b32.xlu0 %v1523, 8
      %v1681 = vpop.permute.xlu0 %1680
      %1682 = vrot.lane.b32.xlu0 %v1524, 8
      %v1683 = vpop.permute.xlu0 %1682
      %1684 = vrot.lane.b32.xlu0 %v1525, 8
      %v1685 = vpop.permute.xlu0 %1684
      %1686 = vrot.lane.b32.xlu0 %v1526, 8
      %v1687 = vpop.permute.xlu0 %1686
      %1688 = vrot.lane.b32.xlu0 %v1527, 8
      %v1689 = vpop.permute.xlu0 %1688
      %1722 = vrot.lane.b32.xlu0 %v1528, 16
      %v1723 = vpop.permute.xlu0 %1722
      %1724 = vrot.lane.b32.xlu0 %v1529, 16
      %v1725 = vpop.permute.xlu0 %1724
      %1726 = vrot.lane.b32.xlu0 %v1530, 16
      %v1727 = vpop.permute.xlu0 %1726
      %1728 = vrot.lane.b32.xlu0 %v1531, 16
      %v1729 = vpop.permute.xlu0 %1728
      %1730 = vrot.lane.b32.xlu0 %v1532, 16
      %v1731 = vpop.permute.xlu0 %1730
      %1732 = vrot.lane.b32.xlu0 %v1533, 16
      %v1733 = vpop.permute.xlu0 %1732
      %1734 = vrot.lane.b32.xlu0 %v1534, 16
      %v1735 = vpop.permute.xlu0 %1734
      %1736 = vrot.lane.b32.xlu0 %v1535, 16
      %v1737 = vpop.permute.xlu0 %1736
      %1738 = vrot.lane.b32.xlu0 %v1536, 16
      %v1739 = vpop.permute.xlu0 %1738
      %1740 = vrot.lane.b32.xlu0 %v1537, 16
      %v1741 = vpop.permute.xlu0 %1740
      %1742 = vrot.lane.b32.xlu0 %v1538, 16
      %v1743 = vpop.permute.xlu0 %1742
      %1744 = vrot.lane.b32.xlu0 %v1539, 16
      %v1745 = vpop.permute.xlu0 %1744
      %1746 = vrot.lane.b32.xlu0 %v1540, 16
      %v1747 = vpop.permute.xlu0 %1746
      %1748 = vrot.lane.b32.xlu0 %v1541, 16
      %v1749 = vpop.permute.xlu0 %1748
      %1750 = vrot.lane.b32.xlu0 %v1542, 16
      %v1751 = vpop.permute.xlu0 %1750
      %1752 = vrot.lane.b32.xlu0 %v1543, 16
      %v1753 = vpop.permute.xlu0 %1752
      %1786 = vrot.lane.b32.xlu0 %v1545, 24
      %v1787 = vpop.permute.xlu0 %1786
      %1788 = vrot.lane.b32.xlu0 %v1546, 24
      %v1789 = vpop.permute.xlu0 %1788
      %1790 = vrot.lane.b32.xlu0 %v1547, 24
      %v1791 = vpop.permute.xlu0 %1790
      %1792 = vrot.lane.b32.xlu0 %v1548, 24
      %v1793 = vpop.permute.xlu0 %1792
      %1794 = vrot.lane.b32.xlu0 %v1549, 24
      %v1795 = vpop.permute.xlu0 %1794
      %1796 = vrot.lane.b32.xlu0 %v1550, 24
      %v1797 = vpop.permute.xlu0 %1796
      %1798 = vrot.lane.b32.xlu0 %v1551, 24
      %v1799 = vpop.permute.xlu0 %1798
      %1800 = vrot.lane.b32.xlu0 %v1552, 24
      %v1801 = vpop.permute.xlu0 %1800
      %1802 = vrot.lane.b32.xlu0 %v1553, 24
      %v1803 = vpop.permute.xlu0 %1802
      %1804 = vrot.lane.b32.xlu0 %v1554, 24
      %v1805 = vpop.permute.xlu0 %1804
      %1806 = vrot.lane.b32.xlu0 %v1555, 24
      %v1807 = vpop.permute.xlu0 %1806
      %1808 = vrot.lane.b32.xlu0 %v1556, 24
      %v1809 = vpop.permute.xlu0 %1808
      %1810 = vrot.lane.b32.xlu0 %v1557, 24
      %v1811 = vpop.permute.xlu0 %1810
      %1812 = vrot.lane.b32.xlu0 %v1558, 24
      %v1813 = vpop.permute.xlu0 %1812
      %1814 = vrot.lane.b32.xlu0 %v1559, 24
      %v1815 = vpop.permute.xlu0 %1814
      %1816 = vrot.lane.b32.xlu0 %v1560, 24
      %v1817 = vpop.permute.xlu0 %1816
      %1850 = vrot.lane.b32.xlu0 %v1561, 32
      %v1851 = vpop.permute.xlu0 %1850
      %1852 = vrot.lane.b32.xlu0 %v1562, 32
      %v1853 = vpop.permute.xlu0 %1852
      %1854 = vrot.lane.b32.xlu0 %v1563, 32
      %v1855 = vpop.permute.xlu0 %1854
      %1856 = vrot.lane.b32.xlu0 %v1564, 32
      %v1857 = vpop.permute.xlu0 %1856
      %1858 = vrot.lane.b32.xlu0 %v1565, 32
      %v1859 = vpop.permute.xlu0 %1858
      %1860 = vrot.lane.b32.xlu0 %v1566, 32
      %v1861 = vpop.permute.xlu0 %1860
      %1862 = vrot.lane.b32.xlu0 %v1567, 32
      %v1863 = vpop.permute.xlu0 %1862
      %1864 = vrot.lane.b32.xlu0 %v1568, 32
      %v1865 = vpop.permute.xlu0 %1864
      %1866 = vrot.lane.b32.xlu0 %v1569, 32
      %v1867 = vpop.permute.xlu0 %1866
      %1868 = vrot.lane.b32.xlu0 %v1570, 32
      %v1869 = vpop.permute.xlu0 %1868
      %1870 = vrot.lane.b32.xlu0 %v1571, 32
      %v1871 = vpop.permute.xlu0 %1870
      %1872 = vrot.lane.b32.xlu0 %v1572, 32
      %v1873 = vpop.permute.xlu0 %1872
      %1874 = vrot.lane.b32.xlu0 %v1573, 32
      %v1875 = vpop.permute.xlu0 %1874
      %1876 = vrot.lane.b32.xlu0 %v1574, 32
      %v1877 = vpop.permute.xlu0 %1876
      %1878 = vrot.lane.b32.xlu0 %v1575, 32
      %v1879 = vpop.permute.xlu0 %1878
      %1880 = vrot.lane.b32.xlu0 %v1576, 32
      %v1881 = vpop.permute.xlu0 %1880
      %1914 = vrot.lane.b32.xlu0 %v1577, 40
      %v1915 = vpop.permute.xlu0 %1914
      %1916 = vrot.lane.b32.xlu0 %v1578, 40
      %v1917 = vpop.permute.xlu0 %1916
      %1918 = vrot.lane.b32.xlu0 %v1579, 40
      %v1919 = vpop.permute.xlu0 %1918
      %1920 = vrot.lane.b32.xlu0 %v1580, 40
      %v1921 = vpop.permute.xlu0 %1920
      %1922 = vrot.lane.b32.xlu0 %v1581, 40
      %v1923 = vpop.permute.xlu0 %1922
      %1924 = vrot.lane.b32.xlu0 %v1582, 40
      %v1925 = vpop.permute.xlu0 %1924
      %1926 = vrot.lane.b32.xlu0 %v1583, 40
      %v1927 = vpop.permute.xlu0 %1926
      %1928 = vrot.lane.b32.xlu0 %v1584, 40
      %v1929 = vpop.permute.xlu0 %1928
      %1930 = vrot.lane.b32.xlu0 %v1585, 40
      %v1931 = vpop.permute.xlu0 %1930
      %1932 = vrot.lane.b32.xlu0 %v1586, 40
      %v1933 = vpop.permute.xlu0 %1932
      %1934 = vrot.lane.b32.xlu0 %v1587, 40
      %v1935 = vpop.permute.xlu0 %1934
      %1936 = vrot.lane.b32.xlu0 %v1588, 40
      %v1937 = vpop.permute.xlu0 %1936
      %1938 = vrot.lane.b32.xlu0 %v1589, 40
      %v1939 = vpop.permute.xlu0 %1938
      %1940 = vrot.lane.b32.xlu0 %v1590, 40
      %v1941 = vpop.permute.xlu0 %1940
      %1942 = vrot.lane.b32.xlu0 %v1591, 40
      %v1943 = vpop.permute.xlu0 %1942
      %1944 = vrot.lane.b32.xlu0 %v1592, 40
      %v1945 = vpop.permute.xlu0 %1944
      %1978 = vrot.lane.b32.xlu0 %v1594, 48
      %v1979 = vpop.permute.xlu0 %1978
      %1980 = vrot.lane.b32.xlu0 %v1595, 48
      %v1981 = vpop.permute.xlu0 %1980
      %1982 = vrot.lane.b32.xlu0 %v1596, 48
      %v1983 = vpop.permute.xlu0 %1982
      %1984 = vrot.lane.b32.xlu0 %v1597, 48
      %v1985 = vpop.permute.xlu0 %1984
      %1986 = vrot.lane.b32.xlu0 %v1598, 48
      %v1987 = vpop.permute.xlu0 %1986
      %1988 = vrot.lane.b32.xlu0 %v1599, 48
      %v1989 = vpop.permute.xlu0 %1988
      %1990 = vrot.lane.b32.xlu0 %v1600, 48
      %v1991 = vpop.permute.xlu0 %1990
      %1992 = vrot.lane.b32.xlu0 %v1601, 48
      %v1993 = vpop.permute.xlu0 %1992
      %1994 = vrot.lane.b32.xlu0 %v1602, 48
      %v1995 = vpop.permute.xlu0 %1994
      %1996 = vrot.lane.b32.xlu0 %v1603, 48
      %v1997 = vpop.permute.xlu0 %1996
      %1998 = vrot.lane.b32.xlu0 %v1604, 48
      %v1999 = vpop.permute.xlu0 %1998
      %2000 = vrot.lane.b32.xlu0 %v1605, 48
      %v2001 = vpop.permute.xlu0 %2000
      %2002 = vrot.lane.b32.xlu0 %v1606, 48
      %v2003 = vpop.permute.xlu0 %2002
      %2004 = vrot.lane.b32.xlu0 %v1607, 48
      %v2005 = vpop.permute.xlu0 %2004
      %2006 = vrot.lane.b32.xlu0 %v1608, 48
      %v2007 = vpop.permute.xlu0 %2006
      %2008 = vrot.lane.b32.xlu0 %v1609, 48
      %v2009 = vpop.permute.xlu0 %2008
      %2042 = vrot.lane.b32.xlu0 %v1610, 56
      %v2043 = vpop.permute.xlu0 %2042
      %2044 = vrot.lane.b32.xlu0 %v1611, 56
      %v2045 = vpop.permute.xlu0 %2044
      %2046 = vrot.lane.b32.xlu0 %v1612, 56
      %v2047 = vpop.permute.xlu0 %2046
      %2048 = vrot.lane.b32.xlu0 %v1613, 56
      %v2049 = vpop.permute.xlu0 %2048
      %2050 = vrot.lane.b32.xlu0 %v1614, 56
      %v2051 = vpop.permute.xlu0 %2050
      %2052 = vrot.lane.b32.xlu0 %v1615, 56
      %v2053 = vpop.permute.xlu0 %2052
      %2054 = vrot.lane.b32.xlu0 %v1616, 56
      %v2055 = vpop.permute.xlu0 %2054
      %2056 = vrot.lane.b32.xlu0 %v1617, 56
      %v2057 = vpop.permute.xlu0 %2056
      %2058 = vrot.lane.b32.xlu0 %v1618, 56
      %v2059 = vpop.permute.xlu0 %2058
      %2060 = vrot.lane.b32.xlu0 %v1619, 56
      %v2061 = vpop.permute.xlu0 %2060
      %2062 = vrot.lane.b32.xlu0 %v1620, 56
      %v2063 = vpop.permute.xlu0 %2062
      %2064 = vrot.lane.b32.xlu0 %v1621, 56
      %v2065 = vpop.permute.xlu0 %2064
      %2066 = vrot.lane.b32.xlu0 %v1622, 56
      %v2067 = vpop.permute.xlu0 %2066
      %2068 = vrot.lane.b32.xlu0 %v1623, 56
      %v2069 = vpop.permute.xlu0 %2068
      %2070 = vrot.lane.b32.xlu0 %v1624, 56
      %v2071 = vpop.permute.xlu0 %2070
      %2072 = vrot.lane.b32.xlu0 %v1625, 56
      %v2073 = vpop.permute.xlu0 %2072
      %2106 = vrot.lane.b32.xlu0 %v1626, 64
      %v2107 = vpop.permute.xlu0 %2106
      %2108 = vrot.lane.b32.xlu0 %v1627, 64
      %v2109 = vpop.permute.xlu0 %2108
      %2110 = vrot.lane.b32.xlu0 %v1628, 64
      %v2111 = vpop.permute.xlu0 %2110
      %2112 = vrot.lane.b32.xlu0 %v1629, 64
      %v2113 = vpop.permute.xlu0 %2112
      %2114 = vrot.lane.b32.xlu0 %v1630, 64
      %v2115 = vpop.permute.xlu0 %2114
      %2116 = vrot.lane.b32.xlu0 %v1631, 64
      %v2117 = vpop.permute.xlu0 %2116
      %2118 = vrot.lane.b32.xlu0 %v1632, 64
      %v2119 = vpop.permute.xlu0 %2118
      %2120 = vrot.lane.b32.xlu0 %v1633, 64
      %v2121 = vpop.permute.xlu0 %2120
      %2122 = vrot.lane.b32.xlu0 %v1634, 64
      %v2123 = vpop.permute.xlu0 %2122
      %2124 = vrot.lane.b32.xlu0 %v1635, 64
      %v2125 = vpop.permute.xlu0 %2124
      %2126 = vrot.lane.b32.xlu0 %v1636, 64
      %v2127 = vpop.permute.xlu0 %2126
      %2128 = vrot.lane.b32.xlu0 %v1637, 64
      %v2129 = vpop.permute.xlu0 %2128
      %2130 = vrot.lane.b32.xlu0 %v1638, 64
      %v2131 = vpop.permute.xlu0 %2130
      %2132 = vrot.lane.b32.xlu0 %v1639, 64
      %v2133 = vpop.permute.xlu0 %2132
      %2134 = vrot.lane.b32.xlu0 %v1640, 64
      %v2135 = vpop.permute.xlu0 %2134
      %2136 = vrot.lane.b32.xlu0 %v1641, 64
      %v2137 = vpop.permute.xlu0 %2136
      %v2154 = vsel %vm1100, %v1496, %v1659
      %v2155 = vsel %vm1100, %v1497, %v1661
      %v2156 = vsel %vm1100, %v1498, %v1663
      %v2157 = vsel %vm1100, %v1499, %v1665
      %v2158 = vsel %vm1100, %v1500, %v1667
      %v2159 = vsel %vm1100, %v1501, %v1669
      %v2160 = vsel %vm1100, %v1502, %v1671
      %v2161 = vsel %vm1100, %v1503, %v1673
      %v2162 = vsel %vm1100, %v1504, %v1675
      %v2163 = vsel %vm1100, %v1505, %v1677
      %v2164 = vsel %vm1100, %v1506, %v1679
      %v2165 = vsel %vm1100, %v1507, %v1681
      %v2166 = vsel %vm1100, %v1508, %v1683
      %v2167 = vsel %vm1100, %v1509, %v1685
      %v2168 = vsel %vm1100, %v1510, %v1687
      %v2169 = vsel %vm1100, %v1511, %v1689
      %v2170 = vsel %vm1142, %v2154, %v1723
      %v2171 = vsel %vm1142, %v2155, %v1725
      %v2172 = vsel %vm1142, %v2156, %v1727
      %v2173 = vsel %vm1142, %v2157, %v1729
      %v2174 = vsel %vm1142, %v2158, %v1731
      %v2175 = vsel %vm1142, %v2159, %v1733
      %v2176 = vsel %vm1142, %v2160, %v1735
      %v2177 = vsel %vm1142, %v2161, %v1737
      %v2178 = vsel %vm1142, %v2162, %v1739
      %v2179 = vsel %vm1142, %v2163, %v1741
      %v2180 = vsel %vm1142, %v2164, %v1743
      %v2181 = vsel %vm1142, %v2165, %v1745
      %v2182 = vsel %vm1142, %v2166, %v1747
      %v2183 = vsel %vm1142, %v2167, %v1749
      %v2184 = vsel %vm1142, %v2168, %v1751
      %v2185 = vsel %vm1142, %v2169, %v1753
      %v2186 = vsel %vm1184, %v2170, %v1787
      %v2187 = vsel %vm1184, %v2171, %v1789
      %v2188 = vsel %vm1184, %v2172, %v1791
      %v2189 = vsel %vm1184, %v2173, %v1793
      %v2190 = vsel %vm1184, %v2174, %v1795
      %v2191 = vsel %vm1184, %v2175, %v1797
      %v2192 = vsel %vm1184, %v2176, %v1799
      %v2193 = vsel %vm1184, %v2177, %v1801
      %v2194 = vsel %vm1184, %v2178, %v1803
      %v2195 = vsel %vm1184, %v2179, %v1805
      %v2196 = vsel %vm1184, %v2180, %v1807
      %v2197 = vsel %vm1184, %v2181, %v1809
      %v2198 = vsel %vm1184, %v2182, %v1811
      %v2199 = vsel %vm1184, %v2183, %v1813
      %v2200 = vsel %vm1184, %v2184, %v1815
      %v2201 = vsel %vm1184, %v2185, %v1817
      %v2202 = vsel %vm1226, %v2186, %v1851
      %v2203 = vsel %vm1226, %v2187, %v1853
      %v2204 = vsel %vm1226, %v2188, %v1855
      %v2205 = vsel %vm1226, %v2189, %v1857
      %v2206 = vsel %vm1226, %v2190, %v1859
      %v2207 = vsel %vm1226, %v2191, %v1861
      %v2208 = vsel %vm1226, %v2192, %v1863
      %v2209 = vsel %vm1226, %v2193, %v1865
      %v2210 = vsel %vm1226, %v2194, %v1867
      %v2211 = vsel %vm1226, %v2195, %v1869
      %v2212 = vsel %vm1226, %v2196, %v1871
      %v2213 = vsel %vm1226, %v2197, %v1873
      %v2214 = vsel %vm1226, %v2198, %v1875
      %v2215 = vsel %vm1226, %v2199, %v1877
      %v2216 = vsel %vm1226, %v2200, %v1879
      %v2217 = vsel %vm1226, %v2201, %v1881
      %vm2218 = vcmask 326656
      %v2219 = vsel %vm2218, %v2202, %v1915
      %v2220 = vsel %vm2218, %v2203, %v1917
      %v2221 = vsel %vm2218, %v2204, %v1919
      %v2222 = vsel %vm2218, %v2205, %v1921
      %v2223 = vsel %vm2218, %v2206, %v1923
      %v2224 = vsel %vm2218, %v2207, %v1925
      %v2225 = vsel %vm2218, %v2208, %v1927
      %v2226 = vsel %vm2218, %v2209, %v1929
      %v2227 = vsel %vm2218, %v2210, %v1931
      %v2228 = vsel %vm2218, %v2211, %v1933
      %v2229 = vsel %vm2218, %v2212, %v1935
      %v2230 = vsel %vm2218, %v2213, %v1937
      %v2231 = vsel %vm2218, %v2214, %v1939
      %v2232 = vsel %vm2218, %v2215, %v1941
      %v2233 = vsel %vm2218, %v2216, %v1943
      %v2234 = vsel %vm2218, %v2217, %v1945
      %vm2235 = vcmask 392192
      %v2236 = vsel %vm2235, %v2219, %v1979
      %v2237 = vsel %vm2235, %v2220, %v1981
      %v2238 = vsel %vm2235, %v2221, %v1983
      %v2239 = vsel %vm2235, %v2222, %v1985
      %v2240 = vsel %vm2235, %v2223, %v1987
      %v2241 = vsel %vm2235, %v2224, %v1989
      %v2242 = vsel %vm2235, %v2225, %v1991
      %v2243 = vsel %vm2235, %v2226, %v1993
      %v2244 = vsel %vm2235, %v2227, %v1995
      %v2245 = vsel %vm2235, %v2228, %v1997
      %v2246 = vsel %vm2235, %v2229, %v1999
      %v2247 = vsel %vm2235, %v2230, %v2001
      %v2248 = vsel %vm2235, %v2231, %v2003
      %v2249 = vsel %vm2235, %v2232, %v2005
      %v2250 = vsel %vm2235, %v2233, %v2007
      %v2251 = vsel %vm2235, %v2234, %v2009
      %vm2252 = vcmask 457728
      %v2253 = vsel %vm2252, %v2236, %v2043
      %v2254 = vsel %vm2252, %v2237, %v2045
      %v2255 = vsel %vm2252, %v2238, %v2047
      %v2256 = vsel %vm2252, %v2239, %v2049
      %v2257 = vsel %vm2252, %v2240, %v2051
      %v2258 = vsel %vm2252, %v2241, %v2053
      %v2259 = vsel %vm2252, %v2242, %v2055
      %v2260 = vsel %vm2252, %v2243, %v2057
      %v2261 = vsel %vm2252, %v2244, %v2059
      %v2262 = vsel %vm2252, %v2245, %v2061
      %v2263 = vsel %vm2252, %v2246, %v2063
      %v2264 = vsel %vm2252, %v2247, %v2065
      %v2265 = vsel %vm2252, %v2248, %v2067
      %v2266 = vsel %vm2252, %v2249, %v2069
      %v2267 = vsel %vm2252, %v2250, %v2071
      %v2268 = vsel %vm2252, %v2251, %v2073
      %vm2269 = vcmask 523264
      %v2270 = vsel %vm2269, %v2253, %v2107
      %v2271 = vsel %vm2269, %v2254, %v2109
      %v2272 = vsel %vm2269, %v2255, %v2111
      %v2273 = vsel %vm2269, %v2256, %v2113
      %v2274 = vsel %vm2269, %v2257, %v2115
      %v2275 = vsel %vm2269, %v2258, %v2117
      %v2276 = vsel %vm2269, %v2259, %v2119
      %v2277 = vsel %vm2269, %v2260, %v2121
      %v2278 = vsel %vm2269, %v2261, %v2123
      %v2279 = vsel %vm2269, %v2262, %v2125
      %v2280 = vsel %vm2269, %v2263, %v2127
      %v2281 = vsel %vm2269, %v2264, %v2129
      %v2282 = vsel %vm2269, %v2265, %v2131
      %v2283 = vsel %vm2269, %v2266, %v2133
      %v2284 = vsel %vm2269, %v2267, %v2135
      %v2285 = vsel %vm2269, %v2268, %v2137
      %v2286 = vld [vmem:[%s3] sm:$0xff]
      %v2287 = vld [vmem:[%s3 + $0x8] sm:$0xff]
      %v2288 = vld [vmem:[%s3 + $0x10] sm:$0xff]
      %v2289 = vld [vmem:[%s3 + $0x18] sm:$0xff]
      %v2290 = vld [vmem:[%s3 + $0x20] sm:$0xff]
      %v2291 = vld [vmem:[%s3 + $0x28] sm:$0xff]
      %v2292 = vld [vmem:[%s3 + $0x30] sm:$0xff]
      %v2293 = vld [vmem:[%s3 + $0x38] sm:$0xff]
      %v2294 = vld [vmem:[%s3 + $0x40] sm:$0xff]
      %v2295 = vld [vmem:[%s4] sm:$0x1]
      %v2297 = vperm.slane %v2295, 0
      %vm2299 = vcmask 588800
      %v2301 = vsel %vm2299, %v2270, 0
      %v2304 = vsel %vm2299, %v2271, 0
      %v2307 = vsel %vm2299, %v2272, 0
      %v2310 = vsel %vm2299, %v2273, 0
      %v2313 = vsel %vm2299, %v2274, 0
      %v2316 = vsel %vm2299, %v2275, 0
      %v2319 = vsel %vm2299, %v2276, 0
      %v2322 = vsel %vm2299, %v2277, 0
      %v2325 = vsel %vm2299, %v2278, 0
      %v2328 = vsel %vm2299, %v2279, 0
      %v2331 = vsel %vm2299, %v2280, 0
      %v2334 = vsel %vm2299, %v2281, 0
      %v2337 = vsel %vm2299, %v2282, 0
      %v2340 = vsel %vm2299, %v2283, 0
      %v2343 = vsel %vm2299, %v2284, 0
      %v2346 = vsel %vm2299, %v2285, 0
      %2348 = vmatpush.msra.mxu0 0.0
      %2349 = vmatpush.msra.mxu0 0.0
      %2350 = vmatpush.msra.mxu0 0.0
      %2351 = vmatpush.msra.mxu0 0.0
      %2352 = vmatpush.msra.mxu0 0.0
      %2353 = vmatpush.msra.mxu0 0.0
      %2354 = vmatpush.msra.mxu0 0.0
      %2355 = vmatpush.msra.mxu0 %v2294
      %2356 = vmatpush.msra.mxu0 %v2293
      %2357 = vmatpush.msra.mxu0 %v2292
      %2358 = vmatpush.msra.mxu0 %v2291
      %2359 = vmatpush.msra.mxu0 %v2290
      %2360 = vmatpush.msra.mxu0 %v2289
      %2361 = vmatpush.msra.mxu0 %v2288
      %2362 = vmatpush.msra.mxu0 %v2287
      %2363 = vmatpush.msra.mxu0 %v2286
      %2364 = vmatmul.f32.gmra.mxu0 %v2301
      %v2365 = vpop.f32.mrf.mxu0
      %v2366 = vadd.f32 %v2297, %v2365
      %2367 = vmatmul.f32.gmra.mxu0 %v2304
      %v2368 = vpop.f32.mrf.mxu0
      %v2369 = vadd.f32 %v2297, %v2368
      %2370 = vmatmul.f32.gmra.mxu0 %v2307
      %v2371 = vpop.f32.mrf.mxu0
      %v2372 = vadd.f32 %v2297, %v2371
      %2373 = vmatmul.f32.gmra.mxu0 %v2310
      %v2374 = vpop.f32.mrf.mxu0
      %v2375 = vadd.f32 %v2297, %v2374
      %2376 = vmatmul.f32.gmra.mxu0 %v2313
      %v2377 = vpop.f32.mrf.mxu0
      %v2378 = vadd.f32 %v2297, %v2377
      %2379 = vmatmul.f32.gmra.mxu0 %v2316
      %v2380 = vpop.f32.mrf.mxu0
      %v2381 = vadd.f32 %v2297, %v2380
      %2382 = vmatmul.f32.gmra.mxu0 %v2319
      %v2383 = vpop.f32.mrf.mxu0
      %v2384 = vadd.f32 %v2297, %v2383
      %2385 = vmatmul.f32.gmra.mxu0 %v2322
      %v2386 = vpop.f32.mrf.mxu0
      %v2387 = vadd.f32 %v2297, %v2386
      %2388 = vmatmul.f32.gmra.mxu0 %v2325
      %v2389 = vpop.f32.mrf.mxu0
      %v2390 = vadd.f32 %v2297, %v2389
      %2391 = vmatmul.f32.gmra.mxu0 %v2328
      %v2392 = vpop.f32.mrf.mxu0
      %v2393 = vadd.f32 %v2297, %v2392
      %2394 = vmatmul.f32.gmra.mxu0 %v2331
      %v2395 = vpop.f32.mrf.mxu0
      %v2396 = vadd.f32 %v2297, %v2395
      %2397 = vmatmul.f32.gmra.mxu0 %v2334
      %v2398 = vpop.f32.mrf.mxu0
      %v2399 = vadd.f32 %v2297, %v2398
      %2400 = vmatmul.f32.gmra.mxu0 %v2337
      %v2401 = vpop.f32.mrf.mxu0
      %v2402 = vadd.f32 %v2297, %v2401
      %2403 = vmatmul.f32.gmra.mxu0 %v2340
      %v2404 = vpop.f32.mrf.mxu0
      %v2405 = vadd.f32 %v2297, %v2404
      %2406 = vmatmul.f32.gmra.mxu0 %v2343
      %v2407 = vpop.f32.mrf.mxu0
      %v2408 = vadd.f32 %v2297, %v2407
      %2409 = vmatmul.f32.gmra.mxu0 %v2346
      %v2410 = vpop.f32.mrf.mxu0
      %v2411 = vadd.f32 %v2297, %v2410
      %2412 = vdwg.mxu0
      %v2413 = vmul.f32 %v2366, 0.2
      %v2414 = vmul.f32 %v2369, 0.2
      %v2415 = vmul.f32 %v2372, 0.2
      %v2416 = vmul.f32 %v2375, 0.2
      %v2417 = vmul.f32 %v2378, 0.2
      %v2418 = vmul.f32 %v2381, 0.2
      %v2419 = vmul.f32 %v2384, 0.2
      %v2420 = vmul.f32 %v2387, 0.2
      %v2421 = vmul.f32 %v2390, 0.2
      %v2422 = vmul.f32 %v2393, 0.2
      %v2423 = vmul.f32 %v2396, 0.2
      %v2424 = vmul.f32 %v2399, 0.2
      %v2425 = vmul.f32 %v2402, 0.2
      %v2426 = vmul.f32 %v2405, 0.2
      %v2427 = vmul.f32 %v2408, 0.2
      %v2428 = vmul.f32 %v2411, 0.2
      %v2429 = vmax.f32 %v2366, %v2413
      %v2430 = vmax.f32 %v2369, %v2414
      %v2431 = vmax.f32 %v2372, %v2415
      %v2432 = vmax.f32 %v2375, %v2416
      %v2433 = vmax.f32 %v2378, %v2417
      %v2434 = vmax.f32 %v2381, %v2418
      %v2435 = vmax.f32 %v2384, %v2419
      %v2436 = vmax.f32 %v2387, %v2420
      %v2437 = vmax.f32 %v2390, %v2421
      %v2438 = vmax.f32 %v2393, %v2422
      %v2439 = vmax.f32 %v2396, %v2423
      %v2440 = vmax.f32 %v2399, %v2424
      %v2441 = vmax.f32 %v2402, %v2425
      %v2442 = vmax.f32 %v2405, %v2426
      %v2443 = vmax.f32 %v2408, %v2427
      %v2444 = vmax.f32 %v2411, %v2428
      %2445 = vst.msk [vmem:[%s248] sm:$0xff] %vm1100, %v2429
      %2446 = vst.msk [vmem:[%s248 + $0x8] sm:$0xff] %vm1100, %v2430
      %2447 = vst.msk [vmem:[%s248 + $0x10] sm:$0xff] %vm1100, %v2431
      %2448 = vst.msk [vmem:[%s248 + $0x18] sm:$0xff] %vm1100, %v2432
      %2449 = vst.msk [vmem:[%s248 + $0x20] sm:$0xff] %vm1100, %v2433
      %2450 = vst.msk [vmem:[%s248 + $0x28] sm:$0xff] %vm1100, %v2434
      %2451 = vst.msk [vmem:[%s248 + $0x30] sm:$0xff] %vm1100, %v2435
      %2452 = vst.msk [vmem:[%s248 + $0x38] sm:$0xff] %vm1100, %v2436
      %2453 = vst.msk [vmem:[%s248 + $0x40] sm:$0xff] %vm1100, %v2437
      %2454 = vst.msk [vmem:[%s248 + $0x48] sm:$0xff] %vm1100, %v2438
      %2455 = vst.msk [vmem:[%s248 + $0x50] sm:$0xff] %vm1100, %v2439
      %2456 = vst.msk [vmem:[%s248 + $0x58] sm:$0xff] %vm1100, %v2440
      %2457 = vst.msk [vmem:[%s248 + $0x60] sm:$0xff] %vm1100, %v2441
      %2458 = vst.msk [vmem:[%s248 + $0x68] sm:$0xff] %vm1100, %v2442
      %2459 = vst.msk [vmem:[%s248 + $0x70] sm:$0xff] %vm1100, %v2443
      %2460 = vst.msk [vmem:[%s248 + $0x78] sm:$0xff] %vm1100, %v2444
      %s2461 = smul.u32 8, %s21
      %p2462 = scmp.lt.s32.totalorder %s20, 1
      %s2463 = scalar_select %p2462, %s20, 1
      %p2464 = scmp.lt.s32.totalorder %s2461, 15
      %s2465 = scalar_select %p2464, %s2461, 15
      %s2466 = smul.addr %s2465, 2
      %s2467 = smul.addr %s2463, 32
      %s2468 = sadd.s32 %s2466, %s2467
      %s2469 = smul.addr %s2468, 8
      %s2470 = scalar_lea.vmem %s5, %s2469
      // Predicated region
      $region49: #{tpu_custom_call.1} parent=39 // pred_check
        %p2471 = pneg %p158
      $region50: #{tpu_custom_call.1} parent=39 // pred_check_branch
        %2473 = sbr.rel (%p2471) target = $region52
      $region51: #{tpu_custom_call.1} parent=39 // pred_region
        %s2474 = smul.u32 8, %s21
      $region52: #{tpu_custom_call.1} parent=39 // pred_fallthru
        _
    $region40: #{tpu_custom_call.1} parent=5 // pred_fallthru
      _
    %p2475 = scmp.le.s32.totalorder 2, %s11
    // Predicated region
    $region53: #{tpu_custom_call.1} parent=5 // pred_check
      %p2476 = pneg %p2475
    $region54: #{tpu_custom_call.1} parent=5 // pred_check_branch
      %2478 = sbr.rel (%p2476) target = $region56
    $region55: #{tpu_custom_call.1} parent=5 // pred_region
      %s2479 = ssub.s32 %s11, 2
      // Predicated region
      $region57: #{tpu_custom_call.1} parent=55 // pred_check
        %p2480 = pneg %p164
      $region58: #{tpu_custom_call.1} parent=55 // pred_check_branch
        %2482 = sbr.rel (%p2480) target = $region60
      $region59: #{tpu_custom_call.1} parent=55 // pred_region
        %s2483 = smul.u32 8, %s23
        %p2484 = scmp.lt.s32.totalorder %s22, 1
        %s2485 = scalar_select %p2484, %s22, 1
        %p2486 = scmp.lt.s32.totalorder %s2483, 15
        %s2487 = scalar_select %p2486, %s2483, 15
        %s2488 = smul.addr %s2487, 2
        %s2489 = smul.addr %s2485, 32
        %s2490 = sadd.s32 %s2488, %s2489
        %s2491 = smul.addr %s2490, 8
        %s2492 = scalar_lea.vmem %s5, %s2491
      $region60: #{tpu_custom_call.1} parent=55 // pred_fallthru
        _
    $region56: #{tpu_custom_call.1} parent=5 // pred_fallthru
      _
  $region6: #{tpu_custom_call.1} parent=0 // loop_footer
    %s15 = sadd.s32 1, %s11
  $region7: #{tpu_custom_call.1} parent=0 // loop_footer_branch
    %10 = sbr.rel target = $region3
  $region8: #{tpu_custom_call.1} parent=0 // loop_exit
    _

</llo_original>
